<compile_context>
chip_gen: v6e
topology: v6e:2x2x1
jax: 0.10.0
libtpu: 0.0.40
codegen_flags: <defaults>
</compile_context>

<pallas_src>
import functools

import jax
import jax.numpy as jnp
from jax.experimental import pallas as pl
from jax.experimental.pallas import tpu as pltpu
import numpy as np


def _round_up(n, m):
    return ((n + m - 1) // m) * m


def _unroll_factor(n_steps, B_pad, H_pad):
    """Partial-unroll factor for the recurrence, bounded by gate-vreg pressure."""
    gate_vregs_per_step = max(1, (B_pad // 8) * (4 * H_pad) // 128)
    return int(max(1, min(n_steps, 8, 32 // gate_vregs_per_step)))


def _pick_vmem_limit_bytes(default_bytes=48 * 1024 * 1024):
    """Per-generation VMEM budget: capacity - 16 MiB headroom, capped at 112 MiB.

    v7x (64 MiB)  -> 48 MiB; v5e/v6e (128 MiB) -> 112 MiB.
    Falls back to the v7x-safe 48 MiB if the hardware query is unavailable.
    """
    try:
        info = pltpu.get_tpu_info()
        cap = getattr(info, "vmem_capacity_bytes", None) or getattr(info, "vmem_bytes", None)
        if cap:
            return int(min(max(int(cap) - 16 * 1024 * 1024, default_bytes),
                           112 * 1024 * 1024))
    except Exception:
        pass
    return default_bytes


def _lstm_kernel(x_ref, w_ih_ref, w_hh_ref, w_lin_ref, b_lin_ref,
                 out_ref, h_sc, c_sc, gx_sc,
                 *, T_chunk, num_chunks, rem, B_pad, H_pad):
    """One grid step = one time-CHUNK. h/c persist in VMEM scratch."""
    chunk = pl.program_id(0)

    @pl.when(chunk == 0)
    def _():
        h_sc[...] = jnp.zeros_like(h_sc)
        c_sc[...] = jnp.zeros_like(c_sc)

    # ---- Prologue: input projection (+ folded bias) for the WHOLE chunk in one
    # MXU matmul. x carries a ones-column at index D, whose matching W_ih^T row
    # holds (b_ih + b_hh), so no separate broadcast bias add is needed.
    gx_sc[...] = jnp.dot(x_ref[...], w_ih_ref[...],
                         preferred_element_type=jnp.float32)

    def sigmoid(z):
        # Exact identity, single EUP op (vs. exp + reciprocal).
        return 0.5 * jnp.tanh(0.5 * z) + 0.5

    def run_steps(n_steps):
        # TODO(synk): hold W_hh resident in MXU weight registers across the
        # chunk via pltpu.matmul_push_rhs/matmul_acc_lhs/matmul_pop (per-gate
        # 128-wide tiles); relying on Mosaic hoisting the RHS push for now.
        def step(t, carry):
            h, c = carry                                      # f32 (B_pad, H_pad)
            row = pl.multiple_of(t * B_pad, B_pad)
            gx = gx_sc[pl.ds(row, B_pad), :]                  # (B_pad, 4*H_pad) f32
            gates = gx + jnp.dot(h.astype(w_hh_ref.dtype), w_hh_ref[...],
                                 preferred_element_type=jnp.float32)
            # Gate slices are 128-lane aligned (H_pad % 128 == 0) -> free views.
            i_g = sigmoid(gates[:, 0 * H_pad:1 * H_pad])
            f_g = sigmoid(gates[:, 1 * H_pad:2 * H_pad])
            g_g = jnp.tanh(gates[:, 2 * H_pad:3 * H_pad])
            o_g = sigmoid(gates[:, 3 * H_pad:4 * H_pad])
            c_new = f_g * c + i_g * g_g
            h_new = o_g * jnp.tanh(c_new)
            return h_new, c_new

        return jax.lax.fori_loop(0, n_steps, step, (h_sc[...], c_sc[...]),
                                 unroll=_unroll_factor(n_steps, B_pad, H_pad))

    def finalize(h_fin):
        out_ref[...] = (jnp.dot(h_fin, w_lin_ref[...],
                                preferred_element_type=jnp.float32)
                        + b_lin_ref[...])

    last = num_chunks - 1
    if num_chunks == 1:
        # Single chunk: run exactly T valid steps, write the output.
        h_fin, c_fin = run_steps(rem if rem else T_chunk)
        h_sc[...] = h_fin
        c_sc[...] = c_fin
        finalize(h_fin)
    elif rem == 0:
        # Every chunk is full: identical body, output written on the last chunk.
        h_fin, c_fin = run_steps(T_chunk)
        h_sc[...] = h_fin
        c_sc[...] = c_fin

        @pl.when(chunk == last)
        def _():
            finalize(h_fin)
    else:
        # Full chunks run T_chunk steps; the last chunk runs only `rem` steps
        # (static trip count -> no per-step masking, no wasted recurrent steps).
        @pl.when(chunk < last)
        def _():
            h_fin, c_fin = run_steps(T_chunk)
            h_sc[...] = h_fin
            c_sc[...] = c_fin

        @pl.when(chunk == last)
        def _():
            h_fin, c_fin = run_steps(rem)
            h_sc[...] = h_fin
            c_sc[...] = c_fin
            finalize(h_fin)


def lstm_forward(x_btd, params, *, t_chunk=32):
    """x_btd: (B, T, D) float32 (PyTorch batch_first layout). Returns (B, O)."""
    w_ih, w_hh, b_ih, b_hh, w_lin, b_lin = (
        params["w_ih"], params["w_hh"], params["b_ih"], params["b_hh"],
        params["w_lin"], params["b_lin"])

    B, T, D = x_btd.shape
    H = w_hh.shape[1]
    O = w_lin.shape[0]

    # Lane/sublane-dense padded sizes.
    B_pad = _round_up(B, 8)
    H_pad = _round_up(H, 128)
    D_pad = _round_up(D + 1, 128)     # +1 spare column carries the folded bias
    O_pad = _round_up(O, 128)

    T_chunk = max(1, min(T, int(t_chunk)))
    if T_chunk < T and T_chunk % 2:
        T_chunk += 1                  # keep bf16 x blocks 16-row (sublane) aligned
    num_chunks = -(-T // T_chunk)
    T_pad = num_chunks * T_chunk
    rem = T % T_chunk                 # valid steps in the last chunk (0 == full)

    # ---- Input: bf16 FIRST (halves host staging traffic), then time-major
    # transpose + pad + flatten to (T_pad*B_pad, D_pad); ones-column for bias.
    x_tbd = jnp.transpose(x_btd.astype(jnp.bfloat16), (1, 0, 2))
    x_tbd = jnp.pad(x_tbd, ((0, T_pad - T), (0, B_pad - B), (0, D_pad - D)))
    x_flat = x_tbd.reshape(T_pad * B_pad, D_pad)
    x_flat = x_flat.at[:, D].set(jnp.asarray(1.0, jnp.bfloat16))

    # ---- Weights: per-gate padded so every gate starts on a 128-lane boundary.
    b_g = jnp.pad((b_ih + b_hh).reshape(4, H), ((0, 0), (0, H_pad - H)))
    w_ih_g = jnp.transpose(w_ih.reshape(4, H, D), (2, 0, 1))       # (D, 4, H)
    w_ih_g = jnp.pad(w_ih_g, ((0, D_pad - D), (0, 0), (0, H_pad - H)))
    w_ih_g = w_ih_g.at[D].set(b_g)                                 # folded bias row
    w_ih_t = w_ih_g.reshape(D_pad, 4 * H_pad).astype(jnp.bfloat16)

    w_hh_g = jnp.transpose(w_hh.reshape(4, H, H), (2, 0, 1))       # (H, 4, H)
    w_hh_g = jnp.pad(w_hh_g, ((0, H_pad - H), (0, 0), (0, H_pad - H)))
    w_hh_t = w_hh_g.reshape(H_pad, 4 * H_pad).astype(jnp.bfloat16)

    w_lin_t = jnp.pad(jnp.transpose(w_lin),
                      ((0, H_pad - H), (0, O_pad - O))).astype(jnp.float32)
    b_lin_r = jnp.pad(b_lin, (0, O_pad - O)).reshape(1, O_pad).astype(jnp.float32)

    kernel = functools.partial(
        _lstm_kernel, T_chunk=T_chunk, num_chunks=num_chunks, rem=rem,
        B_pad=B_pad, H_pad=H_pad)

    grid_spec = pltpu.PrefetchScalarGridSpec(
        num_scalar_prefetch=0,
        grid=(num_chunks,),
        in_specs=[
            pl.BlockSpec((T_chunk * B_pad, D_pad), lambda c: (c, 0)),  # x chunk
            pl.BlockSpec((D_pad, 4 * H_pad), lambda c: (0, 0)),        # W_ih^T (+bias row)
            pl.BlockSpec((H_pad, 4 * H_pad), lambda c: (0, 0)),        # W_hh^T
            pl.BlockSpec((H_pad, O_pad), lambda c: (0, 0)),            # W_lin^T
            pl.BlockSpec((1, O_pad), lambda c: (0, 0)),                # b_lin
        ],
        out_specs=pl.BlockSpec((B_pad, O_pad), lambda c: (0, 0)),
        scratch_shapes=[
            pltpu.VMEM((B_pad, H_pad), jnp.float32),                   # h
            pltpu.VMEM((B_pad, H_pad), jnp.float32),                   # c
            pltpu.VMEM((T_chunk * B_pad, 4 * H_pad), jnp.float32),     # gates_x
        ],
    )

    out_pad = pl.pallas_call(
        kernel,
        out_shape=jax.ShapeDtypeStruct((B_pad, O_pad), jnp.float32),
        grid_spec=grid_spec,
        compiler_params=pltpu.CompilerParams(
            dimension_semantics=("arbitrary",),          # serial recurrence
            vmem_limit_bytes=_pick_vmem_limit_bytes(),
        ),
    )(x_flat, w_ih_t, w_hh_t, w_lin_t, b_lin_r)

    return out_pad[:B, :O]


def lstm_reference(x_btd, params):
    """Pure-JAX f32 reference matching torch.nn.LSTM (+Linear) semantics."""
    w_ih, w_hh, b_ih, b_hh, w_lin, b_lin = (
        params["w_ih"], params["w_hh"], params["b_ih"], params["b_hh"],
        params["w_lin"], params["b_lin"])
    B, T, D = x_btd.shape
    H = w_hh.shape[1]

    def step(carry, x_t):
        h, c = carry
        gates = x_t @ w_ih.T + b_ih + h @ w_hh.T + b_hh
        i = jax.nn.sigmoid(gates[:, 0 * H:1 * H])
        f = jax.nn.sigmoid(gates[:, 1 * H:2 * H])
        g = jnp.tanh(gates[:, 2 * H:3 * H])
        o = jax.nn.sigmoid(gates[:, 3 * H:4 * H])
        c = f * c + i * g
        h = o * jnp.tanh(c)
        return (h, c), None

    init = (jnp.zeros((B, H), jnp.float32), jnp.zeros((B, H), jnp.float32))
    (h_T, _), _ = jax.lax.scan(step, init, jnp.transpose(x_btd, (1, 0, 2)))
    return h_T @ w_lin.T + b_lin


def init_params(key, input_size, hidden_size, output_size=1):
    """Same shapes / uniform(-1/sqrt(H), 1/sqrt(H)) init as PyTorch."""
    ks = jax.random.split(key, 6)
    bound = 1.0 / np.sqrt(hidden_size)
    u = lambda k, shape: jax.random.uniform(k, shape, jnp.float32, -bound, bound)
    return {
        "w_ih": u(ks[0], (4 * hidden_size, input_size)),
        "w_hh": u(ks[1], (4 * hidden_size, hidden_size)),
        "b_ih": u(ks[2], (4 * hidden_size,)),
        "b_hh": u(ks[3], (4 * hidden_size,)),
        "w_lin": u(ks[4], (output_size, hidden_size)),
        "b_lin": u(ks[5], (output_size,)),
    }


if __name__ == "__main__":
    B, T, D, H, O = 2, 8, 4, 32, 1

    key = jax.random.PRNGKey(0)
    k_x, k_p, k_x2, k_x3 = jax.random.split(key, 4)
    params = init_params(k_p, D, H, O)

    # bf16 matmul operands (f32 accumulation / state) -> looser tolerance vs
    # the pure-f32 reference.
    RTOL, ATOL = 3e-2, 3e-2

    # Case 1: demo shape (single time-chunk path).
    x = jax.random.normal(k_x, (B, T, D), dtype=jnp.float32)
    out = jax.block_until_ready(lstm_forward(x, params))
    ref = jax.block_until_ready(lstm_reference(x, params))
    assert out.shape == (B, O)
    np.testing.assert_allclose(np.asarray(out), np.asarray(ref),
                               rtol=RTOL, atol=ATOL)

    # Case 2: multi-chunk with a partial last chunk (rem != 0 path).
    x2 = jax.random.normal(k_x2, (B, 40, D), dtype=jnp.float32)
    out2 = jax.block_until_ready(lstm_forward(x2, params, t_chunk=16))
    ref2 = jax.block_until_ready(lstm_reference(x2, params))
    np.testing.assert_allclose(np.asarray(out2), np.asarray(ref2),
                               rtol=RTOL, atol=ATOL)

    # Case 3: multi-chunk, evenly divisible (rem == 0 path, deferred output write).
    x3 = jax.random.normal(k_x3, (B, 32, D), dtype=jnp.float32)
    out3 = jax.block_until_ready(lstm_forward(x3, params, t_chunk=16))
    ref3 = jax.block_until_ready(lstm_reference(x3, params))
    np.testing.assert_allclose(np.asarray(out3), np.asarray(ref3),
                               rtol=RTOL, atol=ATOL)

    print("KERNEL_OK")
</pallas_src>

<mosaic_0001>
module attributes {stable_mosaic.version = 11 : i64} {
  func.func @_lstm_kernel(%arg0: i32, %arg1: memref<64x128xbf16, #tpu.memory_space<vmem>>, %arg2: memref<128x512xbf16, #tpu.memory_space<vmem>>, %arg3: memref<128x512xbf16, #tpu.memory_space<vmem>>, %arg4: memref<128x128xf32, #tpu.memory_space<vmem>>, %arg5: memref<1x128xf32, #tpu.memory_space<vmem>>, %arg6: memref<8x128xf32, #tpu.memory_space<vmem>>, %arg7: memref<8x128xf32, #tpu.memory_space<vmem>>, %arg8: memref<8x128xf32, #tpu.memory_space<vmem>>, %arg9: memref<64x512xf32, #tpu.memory_space<vmem>>) attributes {dimension_semantics = [#tpu.dimension_semantics<arbitrary>], iteration_bounds = array<i64: 1>, scalar_prefetch = 0 : i64, scratch_operands = 3 : i64, tpu.core_type = #tpu.core_type<tc>, window_params = [{transform_indices = @transform_0, window_bounds = array<i64: 64, 128>}, {pipeline_mode = #tpu.pipeline_mode<synchronous>, transform_indices = @transform_1, window_bounds = array<i64: 128, 512>}, {pipeline_mode = #tpu.pipeline_mode<synchronous>, transform_indices = @transform_2, window_bounds = array<i64: 128, 512>}, {pipeline_mode = #tpu.pipeline_mode<synchronous>, transform_indices = @transform_3, window_bounds = array<i64: 128, 128>}, {pipeline_mode = #tpu.pipeline_mode<synchronous>, transform_indices = @transform_4, window_bounds = array<i64: 1, 128>}, {pipeline_mode = #tpu.pipeline_mode<synchronous>, transform_indices = @transform_5, window_bounds = array<i64: 8, 128>}]} {
    %c0_i32 = arith.constant 0 : i32
    %0 = arith.cmpi eq, %arg0, %c0_i32 : i32
    %1 = arith.extui %0 : i1 to i32
    %c0_i32_0 = arith.constant 0 : i32
    %2 = arith.cmpi ne, %1, %c0_i32_0 : i32
    scf.if %2 {
      %cst_134 = arith.constant 0.000000e+00 : f32
      %329 = vector.broadcast %cst_134 : f32 to vector<8x128xf32>
      %c0_135 = arith.constant 0 : index
      %c0_136 = arith.constant 0 : index
      %330 = vector.load %arg7[%c0_135, %c0_136] : memref<8x128xf32, #tpu.memory_space<vmem>>, vector<8x128xf32>
      tpu.vector_store %arg7[%c0_135, %c0_136], %329 {strides = array<i32>} : memref<8x128xf32, #tpu.memory_space<vmem>>, vector<8x128xf32>,
      %cst_137 = arith.constant 0.000000e+00 : f32
      %331 = vector.broadcast %cst_137 : f32 to vector<8x128xf32>
      %c0_138 = arith.constant 0 : index
      %c0_139 = arith.constant 0 : index
      %332 = vector.load %arg8[%c0_138, %c0_139] : memref<8x128xf32, #tpu.memory_space<vmem>>, vector<8x128xf32>
      tpu.vector_store %arg8[%c0_138, %c0_139], %331 {strides = array<i32>} : memref<8x128xf32, #tpu.memory_space<vmem>>, vector<8x128xf32>,
    } else {
    }
    %c0 = arith.constant 0 : index
    %c0_1 = arith.constant 0 : index
    %3 = vector.load %arg1[%c0, %c0_1] : memref<64x128xbf16, #tpu.memory_space<vmem>>, vector<64x128xbf16>
    %c0_2 = arith.constant 0 : index
    %c0_3 = arith.constant 0 : index
    %4 = vector.load %arg2[%c0_2, %c0_3] : memref<128x512xbf16, #tpu.memory_space<vmem>>, vector<128x512xbf16>
    %cst = arith.constant dense<0.000000e+00> : vector<64x512xf32>
    %5 = tpu.matmul %3, %4, %cst {dimension_numbers = #tpu.dot_dimension_numbers<[1], [0], [0], [1], [0, 0, 1, 1], [], []>} : vector<64x128xbf16>, vector<128x512xbf16>, vector<64x512xf32> -> vector<64x512xf32>
    %c0_4 = arith.constant 0 : index
    %c0_5 = arith.constant 0 : index
    %6 = vector.load %arg9[%c0_4, %c0_5] : memref<64x512xf32, #tpu.memory_space<vmem>>, vector<64x512xf32>
    tpu.vector_store %arg9[%c0_4, %c0_5], %5 {strides = array<i32>} : memref<64x512xf32, #tpu.memory_space<vmem>>, vector<64x512xf32>,
    %c0_6 = arith.constant 0 : index
    %c0_7 = arith.constant 0 : index
    %7 = vector.load %arg7[%c0_6, %c0_7] : memref<8x128xf32, #tpu.memory_space<vmem>>, vector<8x128xf32>
    %c0_8 = arith.constant 0 : index
    %c0_9 = arith.constant 0 : index
    %8 = vector.load %arg8[%c0_8, %c0_9] : memref<8x128xf32, #tpu.memory_space<vmem>>, vector<8x128xf32>
    %c0_i32_10 = arith.constant 0 : i32
    %c8_i32 = arith.constant 8 : i32
    %9 = arith.muli %c0_i32_10, %c8_i32 : i32
    %10 = tpu.assume_multiple %9, 8 : i32
    %11 = arith.index_cast %10 : i32 to index
    %c0_11 = arith.constant 0 : index
    %12 = vector.load %arg9[%11, %c0_11] : memref<64x512xf32, #tpu.memory_space<vmem>>, vector<8x512xf32>
    %13 = arith.truncf %7 : vector<8x128xf32> to vector<8x128xbf16>
    %c0_12 = arith.constant 0 : index
    %c0_13 = arith.constant 0 : index
    %14 = vector.load %arg3[%c0_12, %c0_13] : memref<128x512xbf16, #tpu.memory_space<vmem>>, vector<128x512xbf16>
    %cst_14 = arith.constant dense<0.000000e+00> : vector<8x512xf32>
    %15 = tpu.matmul %13, %14, %cst_14 {dimension_numbers = #tpu.dot_dimension_numbers<[1], [0], [0], [1], [0, 0, 1, 1], [], []>} : vector<8x128xbf16>, vector<128x512xbf16>, vector<8x512xf32> -> vector<8x512xf32>
    %16 = arith.addf %12, %15 : vector<8x512xf32>
    %17 = vector.extract_strided_slice %16 {offsets = [0, 0], sizes = [8, 128], strides = [1, 1]} : vector<8x512xf32> to vector<8x128xf32>
    %cst_15 = arith.constant 5.000000e-01 : f32
    %18 = vector.broadcast %cst_15 : f32 to vector<8x128xf32>
    %19 = arith.mulf %18, %17 : vector<8x128xf32>
    %20 = math.tanh %19 : vector<8x128xf32>
    %cst_16 = arith.constant 5.000000e-01 : f32
    %21 = vector.broadcast %cst_16 : f32 to vector<8x128xf32>
    %22 = arith.mulf %21, %20 : vector<8x128xf32>
    %cst_17 = arith.constant 5.000000e-01 : f32
    %23 = vector.broadcast %cst_17 : f32 to vector<8x128xf32>
    %24 = arith.addf %22, %23 : vector<8x128xf32>
    %25 = vector.extract_strided_slice %16 {offsets = [0, 128], sizes = [8, 128], strides = [1, 1]} : vector<8x512xf32> to vector<8x128xf32>
    %cst_18 = arith.constant 5.000000e-01 : f32
    %26 = vector.broadcast %cst_18 : f32 to vector<8x128xf32>
    %27 = arith.mulf %26, %25 : vector<8x128xf32>
    %28 = math.tanh %27 : vector<8x128xf32>
    %cst_19 = arith.constant 5.000000e-01 : f32
    %29 = vector.broadcast %cst_19 : f32 to vector<8x128xf32>
    %30 = arith.mulf %29, %28 : vector<8x128xf32>
    %cst_20 = arith.constant 5.000000e-01 : f32
    %31 = vector.broadcast %cst_20 : f32 to vector<8x128xf32>
    %32 = arith.addf %30, %31 : vector<8x128xf32>
    %33 = vector.extract_strided_slice %16 {offsets = [0, 256], sizes = [8, 128], strides = [1, 1]} : vector<8x512xf32> to vector<8x128xf32>
    %34 = math.tanh %33 : vector<8x128xf32>
    %35 = vector.extract_strided_slice %16 {offsets = [0, 384], sizes = [8, 128], strides = [1, 1]} : vector<8x512xf32> to vector<8x128xf32>
    %cst_21 = arith.constant 5.000000e-01 : f32
    %36 = vector.broadcast %cst_21 : f32 to vector<8x128xf32>
    %37 = arith.mulf %36, %35 : vector<8x128xf32>
    %38 = math.tanh %37 : vector<8x128xf32>
    %cst_22 = arith.constant 5.000000e-01 : f32
    %39 = vector.broadcast %cst_22 : f32 to vector<8x128xf32>
    %40 = arith.mulf %39, %38 : vector<8x128xf32>
    %cst_23 = arith.constant 5.000000e-01 : f32
    %41 = vector.broadcast %cst_23 : f32 to vector<8x128xf32>
    %42 = arith.addf %40, %41 : vector<8x128xf32>
    %43 = arith.mulf %32, %8 : vector<8x128xf32>
    %44 = arith.mulf %24, %34 : vector<8x128xf32>
    %45 = arith.addf %43, %44 : vector<8x128xf32>
    %46 = math.tanh %45 : vector<8x128xf32>
    %47 = arith.mulf %42, %46 : vector<8x128xf32>
    %c1_i32 = arith.constant 1 : i32
    %c8_i32_24 = arith.constant 8 : i32
    %48 = arith.muli %c1_i32, %c8_i32_24 : i32
    %49 = tpu.assume_multiple %48, 8 : i32
    %50 = arith.index_cast %49 : i32 to index
    %c0_25 = arith.constant 0 : index
    %51 = vector.load %arg9[%50, %c0_25] : memref<64x512xf32, #tpu.memory_space<vmem>>, vector<8x512xf32>
    %52 = arith.truncf %47 : vector<8x128xf32> to vector<8x128xbf16>
    %c0_26 = arith.constant 0 : index
    %c0_27 = arith.constant 0 : index
    %53 = vector.load %arg3[%c0_26, %c0_27] : memref<128x512xbf16, #tpu.memory_space<vmem>>, vector<128x512xbf16>
    %cst_28 = arith.constant dense<0.000000e+00> : vector<8x512xf32>
    %54 = tpu.matmul %52, %53, %cst_28 {dimension_numbers = #tpu.dot_dimension_numbers<[1], [0], [0], [1], [0, 0, 1, 1], [], []>} : vector<8x128xbf16>, vector<128x512xbf16>, vector<8x512xf32> -> vector<8x512xf32>
    %55 = arith.addf %51, %54 : vector<8x512xf32>
    %56 = vector.extract_strided_slice %55 {offsets = [0, 0], sizes = [8, 128], strides = [1, 1]} : vector<8x512xf32> to vector<8x128xf32>
    %cst_29 = arith.constant 5.000000e-01 : f32
    %57 = vector.broadcast %cst_29 : f32 to vector<8x128xf32>
    %58 = arith.mulf %57, %56 : vector<8x128xf32>
    %59 = math.tanh %58 : vector<8x128xf32>
    %cst_30 = arith.constant 5.000000e-01 : f32
    %60 = vector.broadcast %cst_30 : f32 to vector<8x128xf32>
    %61 = arith.mulf %60, %59 : vector<8x128xf32>
    %cst_31 = arith.constant 5.000000e-01 : f32
    %62 = vector.broadcast %cst_31 : f32 to vector<8x128xf32>
    %63 = arith.addf %61, %62 : vector<8x128xf32>
    %64 = vector.extract_strided_slice %55 {offsets = [0, 128], sizes = [8, 128], strides = [1, 1]} : vector<8x512xf32> to vector<8x128xf32>
    %cst_32 = arith.constant 5.000000e-01 : f32
    %65 = vector.broadcast %cst_32 : f32 to vector<8x128xf32>
    %66 = arith.mulf %65, %64 : vector<8x128xf32>
    %67 = math.tanh %66 : vector<8x128xf32>
    %cst_33 = arith.constant 5.000000e-01 : f32
    %68 = vector.broadcast %cst_33 : f32 to vector<8x128xf32>
    %69 = arith.mulf %68, %67 : vector<8x128xf32>
    %cst_34 = arith.constant 5.000000e-01 : f32
    %70 = vector.broadcast %cst_34 : f32 to vector<8x128xf32>
    %71 = arith.addf %69, %70 : vector<8x128xf32>
    %72 = vector.extract_strided_slice %55 {offsets = [0, 256], sizes = [8, 128], strides = [1, 1]} : vector<8x512xf32> to vector<8x128xf32>
    %73 = math.tanh %72 : vector<8x128xf32>
    %74 = vector.extract_strided_slice %55 {offsets = [0, 384], sizes = [8, 128], strides = [1, 1]} : vector<8x512xf32> to vector<8x128xf32>
    %cst_35 = arith.constant 5.000000e-01 : f32
    %75 = vector.broadcast %cst_35 : f32 to vector<8x128xf32>
    %76 = arith.mulf %75, %74 : vector<8x128xf32>
    %77 = math.tanh %76 : vector<8x128xf32>
    %cst_36 = arith.constant 5.000000e-01 : f32
    %78 = vector.broadcast %cst_36 : f32 to vector<8x128xf32>
    %79 = arith.mulf %78, %77 : vector<8x128xf32>
    %cst_37 = arith.constant 5.000000e-01 : f32
    %80 = vector.broadcast %cst_37 : f32 to vector<8x128xf32>
    %81 = arith.addf %79, %80 : vector<8x128xf32>
    %82 = arith.mulf %71, %45 : vector<8x128xf32>
    %83 = arith.mulf %63, %73 : vector<8x128xf32>
    %84 = arith.addf %82, %83 : vector<8x128xf32>
    %85 = math.tanh %84 : vector<8x128xf32>
    %86 = arith.mulf %81, %85 : vector<8x128xf32>
    %c2_i32 = arith.constant 2 : i32
    %c8_i32_38 = arith.constant 8 : i32
    %87 = arith.muli %c2_i32, %c8_i32_38 : i32
    %88 = tpu.assume_multiple %87, 8 : i32
    %89 = arith.index_cast %88 : i32 to index
    %c0_39 = arith.constant 0 : index
    %90 = vector.load %arg9[%89, %c0_39] : memref<64x512xf32, #tpu.memory_space<vmem>>, vector<8x512xf32>
    %91 = arith.truncf %86 : vector<8x128xf32> to vector<8x128xbf16>
    %c0_40 = arith.constant 0 : index
    %c0_41 = arith.constant 0 : index
    %92 = vector.load %arg3[%c0_40, %c0_41] : memref<128x512xbf16, #tpu.memory_space<vmem>>, vector<128x512xbf16>
    %cst_42 = arith.constant dense<0.000000e+00> : vector<8x512xf32>
    %93 = tpu.matmul %91, %92, %cst_42 {dimension_numbers = #tpu.dot_dimension_numbers<[1], [0], [0], [1], [0, 0, 1, 1], [], []>} : vector<8x128xbf16>, vector<128x512xbf16>, vector<8x512xf32> -> vector<8x512xf32>
    %94 = arith.addf %90, %93 : vector<8x512xf32>
    %95 = vector.extract_strided_slice %94 {offsets = [0, 0], sizes = [8, 128], strides = [1, 1]} : vector<8x512xf32> to vector<8x128xf32>
    %cst_43 = arith.constant 5.000000e-01 : f32
    %96 = vector.broadcast %cst_43 : f32 to vector<8x128xf32>
    %97 = arith.mulf %96, %95 : vector<8x128xf32>
    %98 = math.tanh %97 : vector<8x128xf32>
    %cst_44 = arith.constant 5.000000e-01 : f32
    %99 = vector.broadcast %cst_44 : f32 to vector<8x128xf32>
    %100 = arith.mulf %99, %98 : vector<8x128xf32>
    %cst_45 = arith.constant 5.000000e-01 : f32
    %101 = vector.broadcast %cst_45 : f32 to vector<8x128xf32>
    %102 = arith.addf %100, %101 : vector<8x128xf32>
    %103 = vector.extract_strided_slice %94 {offsets = [0, 128], sizes = [8, 128], strides = [1, 1]} : vector<8x512xf32> to vector<8x128xf32>
    %cst_46 = arith.constant 5.000000e-01 : f32
    %104 = vector.broadcast %cst_46 : f32 to vector<8x128xf32>
    %105 = arith.mulf %104, %103 : vector<8x128xf32>
    %106 = math.tanh %105 : vector<8x128xf32>
    %cst_47 = arith.constant 5.000000e-01 : f32
    %107 = vector.broadcast %cst_47 : f32 to vector<8x128xf32>
    %108 = arith.mulf %107, %106 : vector<8x128xf32>
    %cst_48 = arith.constant 5.000000e-01 : f32
    %109 = vector.broadcast %cst_48 : f32 to vector<8x128xf32>
    %110 = arith.addf %108, %109 : vector<8x128xf32>
    %111 = vector.extract_strided_slice %94 {offsets = [0, 256], sizes = [8, 128], strides = [1, 1]} : vector<8x512xf32> to vector<8x128xf32>
    %112 = math.tanh %111 : vector<8x128xf32>
    %113 = vector.extract_strided_slice %94 {offsets = [0, 384], sizes = [8, 128], strides = [1, 1]} : vector<8x512xf32> to vector<8x128xf32>
    %cst_49 = arith.constant 5.000000e-01 : f32
    %114 = vector.broadcast %cst_49 : f32 to vector<8x128xf32>
    %115 = arith.mulf %114, %113 : vector<8x128xf32>
    %116 = math.tanh %115 : vector<8x128xf32>
    %cst_50 = arith.constant 5.000000e-01 : f32
    %117 = vector.broadcast %cst_50 : f32 to vector<8x128xf32>
    %118 = arith.mulf %117, %116 : vector<8x128xf32>
    %cst_51 = arith.constant 5.000000e-01 : f32
    %119 = vector.broadcast %cst_51 : f32 to vector<8x128xf32>
    %120 = arith.addf %118, %119 : vector<8x128xf32>
    %121 = arith.mulf %110, %84 : vector<8x128xf32>
    %122 = arith.mulf %102, %112 : vector<8x128xf32>
    %123 = arith.addf %121, %122 : vector<8x128xf32>
    %124 = math.tanh %123 : vector<8x128xf32>
    %125 = arith.mulf %120, %124 : vector<8x128xf32>
    %c3_i32 = arith.constant 3 : i32
    %c8_i32_52 = arith.constant 8 : i32
    %126 = arith.muli %c3_i32, %c8_i32_52 : i32
    %127 = tpu.assume_multiple %126, 8 : i32
    %128 = arith.index_cast %127 : i32 to index
    %c0_53 = arith.constant 0 : index
    %129 = vector.load %arg9[%128, %c0_53] : memref<64x512xf32, #tpu.memory_space<vmem>>, vector<8x512xf32>
    %130 = arith.truncf %125 : vector<8x128xf32> to vector<8x128xbf16>
    %c0_54 = arith.constant 0 : index
    %c0_55 = arith.constant 0 : index
    %131 = vector.load %arg3[%c0_54, %c0_55] : memref<128x512xbf16, #tpu.memory_space<vmem>>, vector<128x512xbf16>
    %cst_56 = arith.constant dense<0.000000e+00> : vector<8x512xf32>
    %132 = tpu.matmul %130, %131, %cst_56 {dimension_numbers = #tpu.dot_dimension_numbers<[1], [0], [0], [1], [0, 0, 1, 1], [], []>} : vector<8x128xbf16>, vector<128x512xbf16>, vector<8x512xf32> -> vector<8x512xf32>
    %133 = arith.addf %129, %132 : vector<8x512xf32>
    %134 = vector.extract_strided_slice %133 {offsets = [0, 0], sizes = [8, 128], strides = [1, 1]} : vector<8x512xf32> to vector<8x128xf32>
    %cst_57 = arith.constant 5.000000e-01 : f32
    %135 = vector.broadcast %cst_57 : f32 to vector<8x128xf32>
    %136 = arith.mulf %135, %134 : vector<8x128xf32>
    %137 = math.tanh %136 : vector<8x128xf32>
    %cst_58 = arith.constant 5.000000e-01 : f32
    %138 = vector.broadcast %cst_58 : f32 to vector<8x128xf32>
    %139 = arith.mulf %138, %137 : vector<8x128xf32>
    %cst_59 = arith.constant 5.000000e-01 : f32
    %140 = vector.broadcast %cst_59 : f32 to vector<8x128xf32>
    %141 = arith.addf %139, %140 : vector<8x128xf32>
    %142 = vector.extract_strided_slice %133 {offsets = [0, 128], sizes = [8, 128], strides = [1, 1]} : vector<8x512xf32> to vector<8x128xf32>
    %cst_60 = arith.constant 5.000000e-01 : f32
    %143 = vector.broadcast %cst_60 : f32 to vector<8x128xf32>
    %144 = arith.mulf %143, %142 : vector<8x128xf32>
    %145 = math.tanh %144 : vector<8x128xf32>
    %cst_61 = arith.constant 5.000000e-01 : f32
    %146 = vector.broadcast %cst_61 : f32 to vector<8x128xf32>
    %147 = arith.mulf %146, %145 : vector<8x128xf32>
    %cst_62 = arith.constant 5.000000e-01 : f32
    %148 = vector.broadcast %cst_62 : f32 to vector<8x128xf32>
    %149 = arith.addf %147, %148 : vector<8x128xf32>
    %150 = vector.extract_strided_slice %133 {offsets = [0, 256], sizes = [8, 128], strides = [1, 1]} : vector<8x512xf32> to vector<8x128xf32>
    %151 = math.tanh %150 : vector<8x128xf32>
    %152 = vector.extract_strided_slice %133 {offsets = [0, 384], sizes = [8, 128], strides = [1, 1]} : vector<8x512xf32> to vector<8x128xf32>
    %cst_63 = arith.constant 5.000000e-01 : f32
    %153 = vector.broadcast %cst_63 : f32 to vector<8x128xf32>
    %154 = arith.mulf %153, %152 : vector<8x128xf32>
    %155 = math.tanh %154 : vector<8x128xf32>
    %cst_64 = arith.constant 5.000000e-01 : f32
    %156 = vector.broadcast %cst_64 : f32 to vector<8x128xf32>
    %157 = arith.mulf %156, %155 : vector<8x128xf32>
    %cst_65 = arith.constant 5.000000e-01 : f32
    %158 = vector.broadcast %cst_65 : f32 to vector<8x128xf32>
    %159 = arith.addf %157, %158 : vector<8x128xf32>
    %160 = arith.mulf %149, %123 : vector<8x128xf32>
    %161 = arith.mulf %141, %151 : vector<8x128xf32>
    %162 = arith.addf %160, %161 : vector<8x128xf32>
    %163 = math.tanh %162 : vector<8x128xf32>
    %164 = arith.mulf %159, %163 : vector<8x128xf32>
    %c4_i32 = arith.constant 4 : i32
    %c8_i32_66 = arith.constant 8 : i32
    %165 = arith.muli %c4_i32, %c8_i32_66 : i32
    %166 = tpu.assume_multiple %165, 8 : i32
    %167 = arith.index_cast %166 : i32 to index
    %c0_67 = arith.constant 0 : index
    %168 = vector.load %arg9[%167, %c0_67] : memref<64x512xf32, #tpu.memory_space<vmem>>, vector<8x512xf32>
    %169 = arith.truncf %164 : vector<8x128xf32> to vector<8x128xbf16>
    %c0_68 = arith.constant 0 : index
    %c0_69 = arith.constant 0 : index
    %170 = vector.load %arg3[%c0_68, %c0_69] : memref<128x512xbf16, #tpu.memory_space<vmem>>, vector<128x512xbf16>
    %cst_70 = arith.constant dense<0.000000e+00> : vector<8x512xf32>
    %171 = tpu.matmul %169, %170, %cst_70 {dimension_numbers = #tpu.dot_dimension_numbers<[1], [0], [0], [1], [0, 0, 1, 1], [], []>} : vector<8x128xbf16>, vector<128x512xbf16>, vector<8x512xf32> -> vector<8x512xf32>
    %172 = arith.addf %168, %171 : vector<8x512xf32>
    %173 = vector.extract_strided_slice %172 {offsets = [0, 0], sizes = [8, 128], strides = [1, 1]} : vector<8x512xf32> to vector<8x128xf32>
    %cst_71 = arith.constant 5.000000e-01 : f32
    %174 = vector.broadcast %cst_71 : f32 to vector<8x128xf32>
    %175 = arith.mulf %174, %173 : vector<8x128xf32>
    %176 = math.tanh %175 : vector<8x128xf32>
    %cst_72 = arith.constant 5.000000e-01 : f32
    %177 = vector.broadcast %cst_72 : f32 to vector<8x128xf32>
    %178 = arith.mulf %177, %176 : vector<8x128xf32>
    %cst_73 = arith.constant 5.000000e-01 : f32
    %179 = vector.broadcast %cst_73 : f32 to vector<8x128xf32>
    %180 = arith.addf %178, %179 : vector<8x128xf32>
    %181 = vector.extract_strided_slice %172 {offsets = [0, 128], sizes = [8, 128], strides = [1, 1]} : vector<8x512xf32> to vector<8x128xf32>
    %cst_74 = arith.constant 5.000000e-01 : f32
    %182 = vector.broadcast %cst_74 : f32 to vector<8x128xf32>
    %183 = arith.mulf %182, %181 : vector<8x128xf32>
    %184 = math.tanh %183 : vector<8x128xf32>
    %cst_75 = arith.constant 5.000000e-01 : f32
    %185 = vector.broadcast %cst_75 : f32 to vector<8x128xf32>
    %186 = arith.mulf %185, %184 : vector<8x128xf32>
    %cst_76 = arith.constant 5.000000e-01 : f32
    %187 = vector.broadcast %cst_76 : f32 to vector<8x128xf32>
    %188 = arith.addf %186, %187 : vector<8x128xf32>
    %189 = vector.extract_strided_slice %172 {offsets = [0, 256], sizes = [8, 128], strides = [1, 1]} : vector<8x512xf32> to vector<8x128xf32>
    %190 = math.tanh %189 : vector<8x128xf32>
    %191 = vector.extract_strided_slice %172 {offsets = [0, 384], sizes = [8, 128], strides = [1, 1]} : vector<8x512xf32> to vector<8x128xf32>
    %cst_77 = arith.constant 5.000000e-01 : f32
    %192 = vector.broadcast %cst_77 : f32 to vector<8x128xf32>
    %193 = arith.mulf %192, %191 : vector<8x128xf32>
    %194 = math.tanh %193 : vector<8x128xf32>
    %cst_78 = arith.constant 5.000000e-01 : f32
    %195 = vector.broadcast %cst_78 : f32 to vector<8x128xf32>
    %196 = arith.mulf %195, %194 : vector<8x128xf32>
    %cst_79 = arith.constant 5.000000e-01 : f32
    %197 = vector.broadcast %cst_79 : f32 to vector<8x128xf32>
    %198 = arith.addf %196, %197 : vector<8x128xf32>
    %199 = arith.mulf %188, %162 : vector<8x128xf32>
    %200 = arith.mulf %180, %190 : vector<8x128xf32>
    %201 = arith.addf %199, %200 : vector<8x128xf32>
    %202 = math.tanh %201 : vector<8x128xf32>
    %203 = arith.mulf %198, %202 : vector<8x128xf32>
    %c5_i32 = arith.constant 5 : i32
    %c8_i32_80 = arith.constant 8 : i32
    %204 = arith.muli %c5_i32, %c8_i32_80 : i32
    %205 = tpu.assume_multiple %204, 8 : i32
    %206 = arith.index_cast %205 : i32 to index
    %c0_81 = arith.constant 0 : index
    %207 = vector.load %arg9[%206, %c0_81] : memref<64x512xf32, #tpu.memory_space<vmem>>, vector<8x512xf32>
    %208 = arith.truncf %203 : vector<8x128xf32> to vector<8x128xbf16>
    %c0_82 = arith.constant 0 : index
    %c0_83 = arith.constant 0 : index
    %209 = vector.load %arg3[%c0_82, %c0_83] : memref<128x512xbf16, #tpu.memory_space<vmem>>, vector<128x512xbf16>
    %cst_84 = arith.constant dense<0.000000e+00> : vector<8x512xf32>
    %210 = tpu.matmul %208, %209, %cst_84 {dimension_numbers = #tpu.dot_dimension_numbers<[1], [0], [0], [1], [0, 0, 1, 1], [], []>} : vector<8x128xbf16>, vector<128x512xbf16>, vector<8x512xf32> -> vector<8x512xf32>
    %211 = arith.addf %207, %210 : vector<8x512xf32>
    %212 = vector.extract_strided_slice %211 {offsets = [0, 0], sizes = [8, 128], strides = [1, 1]} : vector<8x512xf32> to vector<8x128xf32>
    %cst_85 = arith.constant 5.000000e-01 : f32
    %213 = vector.broadcast %cst_85 : f32 to vector<8x128xf32>
    %214 = arith.mulf %213, %212 : vector<8x128xf32>
    %215 = math.tanh %214 : vector<8x128xf32>
    %cst_86 = arith.constant 5.000000e-01 : f32
    %216 = vector.broadcast %cst_86 : f32 to vector<8x128xf32>
    %217 = arith.mulf %216, %215 : vector<8x128xf32>
    %cst_87 = arith.constant 5.000000e-01 : f32
    %218 = vector.broadcast %cst_87 : f32 to vector<8x128xf32>
    %219 = arith.addf %217, %218 : vector<8x128xf32>
    %220 = vector.extract_strided_slice %211 {offsets = [0, 128], sizes = [8, 128], strides = [1, 1]} : vector<8x512xf32> to vector<8x128xf32>
    %cst_88 = arith.constant 5.000000e-01 : f32
    %221 = vector.broadcast %cst_88 : f32 to vector<8x128xf32>
    %222 = arith.mulf %221, %220 : vector<8x128xf32>
    %223 = math.tanh %222 : vector<8x128xf32>
    %cst_89 = arith.constant 5.000000e-01 : f32
    %224 = vector.broadcast %cst_89 : f32 to vector<8x128xf32>
    %225 = arith.mulf %224, %223 : vector<8x128xf32>
    %cst_90 = arith.constant 5.000000e-01 : f32
    %226 = vector.broadcast %cst_90 : f32 to vector<8x128xf32>
    %227 = arith.addf %225, %226 : vector<8x128xf32>
    %228 = vector.extract_strided_slice %211 {offsets = [0, 256], sizes = [8, 128], strides = [1, 1]} : vector<8x512xf32> to vector<8x128xf32>
    %229 = math.tanh %228 : vector<8x128xf32>
    %230 = vector.extract_strided_slice %211 {offsets = [0, 384], sizes = [8, 128], strides = [1, 1]} : vector<8x512xf32> to vector<8x128xf32>
    %cst_91 = arith.constant 5.000000e-01 : f32
    %231 = vector.broadcast %cst_91 : f32 to vector<8x128xf32>
    %232 = arith.mulf %231, %230 : vector<8x128xf32>
    %233 = math.tanh %232 : vector<8x128xf32>
    %cst_92 = arith.constant 5.000000e-01 : f32
    %234 = vector.broadcast %cst_92 : f32 to vector<8x128xf32>
    %235 = arith.mulf %234, %233 : vector<8x128xf32>
    %cst_93 = arith.constant 5.000000e-01 : f32
    %236 = vector.broadcast %cst_93 : f32 to vector<8x128xf32>
    %237 = arith.addf %235, %236 : vector<8x128xf32>
    %238 = arith.mulf %227, %201 : vector<8x128xf32>
    %239 = arith.mulf %219, %229 : vector<8x128xf32>
    %240 = arith.addf %238, %239 : vector<8x128xf32>
    %241 = math.tanh %240 : vector<8x128xf32>
    %242 = arith.mulf %237, %241 : vector<8x128xf32>
    %c6_i32 = arith.constant 6 : i32
    %c8_i32_94 = arith.constant 8 : i32
    %243 = arith.muli %c6_i32, %c8_i32_94 : i32
    %244 = tpu.assume_multiple %243, 8 : i32
    %245 = arith.index_cast %244 : i32 to index
    %c0_95 = arith.constant 0 : index
    %246 = vector.load %arg9[%245, %c0_95] : memref<64x512xf32, #tpu.memory_space<vmem>>, vector<8x512xf32>
    %247 = arith.truncf %242 : vector<8x128xf32> to vector<8x128xbf16>
    %c0_96 = arith.constant 0 : index
    %c0_97 = arith.constant 0 : index
    %248 = vector.load %arg3[%c0_96, %c0_97] : memref<128x512xbf16, #tpu.memory_space<vmem>>, vector<128x512xbf16>
    %cst_98 = arith.constant dense<0.000000e+00> : vector<8x512xf32>
    %249 = tpu.matmul %247, %248, %cst_98 {dimension_numbers = #tpu.dot_dimension_numbers<[1], [0], [0], [1], [0, 0, 1, 1], [], []>} : vector<8x128xbf16>, vector<128x512xbf16>, vector<8x512xf32> -> vector<8x512xf32>
    %250 = arith.addf %246, %249 : vector<8x512xf32>
    %251 = vector.extract_strided_slice %250 {offsets = [0, 0], sizes = [8, 128], strides = [1, 1]} : vector<8x512xf32> to vector<8x128xf32>
    %cst_99 = arith.constant 5.000000e-01 : f32
    %252 = vector.broadcast %cst_99 : f32 to vector<8x128xf32>
    %253 = arith.mulf %252, %251 : vector<8x128xf32>
    %254 = math.tanh %253 : vector<8x128xf32>
    %cst_100 = arith.constant 5.000000e-01 : f32
    %255 = vector.broadcast %cst_100 : f32 to vector<8x128xf32>
    %256 = arith.mulf %255, %254 : vector<8x128xf32>
    %cst_101 = arith.constant 5.000000e-01 : f32
    %257 = vector.broadcast %cst_101 : f32 to vector<8x128xf32>
    %258 = arith.addf %256, %257 : vector<8x128xf32>
    %259 = vector.extract_strided_slice %250 {offsets = [0, 128], sizes = [8, 128], strides = [1, 1]} : vector<8x512xf32> to vector<8x128xf32>
    %cst_102 = arith.constant 5.000000e-01 : f32
    %260 = vector.broadcast %cst_102 : f32 to vector<8x128xf32>
    %261 = arith.mulf %260, %259 : vector<8x128xf32>
    %262 = math.tanh %261 : vector<8x128xf32>
    %cst_103 = arith.constant 5.000000e-01 : f32
    %263 = vector.broadcast %cst_103 : f32 to vector<8x128xf32>
    %264 = arith.mulf %263, %262 : vector<8x128xf32>
    %cst_104 = arith.constant 5.000000e-01 : f32
    %265 = vector.broadcast %cst_104 : f32 to vector<8x128xf32>
    %266 = arith.addf %264, %265 : vector<8x128xf32>
    %267 = vector.extract_strided_slice %250 {offsets = [0, 256], sizes = [8, 128], strides = [1, 1]} : vector<8x512xf32> to vector<8x128xf32>
    %268 = math.tanh %267 : vector<8x128xf32>
    %269 = vector.extract_strided_slice %250 {offsets = [0, 384], sizes = [8, 128], strides = [1, 1]} : vector<8x512xf32> to vector<8x128xf32>
    %cst_105 = arith.constant 5.000000e-01 : f32
    %270 = vector.broadcast %cst_105 : f32 to vector<8x128xf32>
    %271 = arith.mulf %270, %269 : vector<8x128xf32>
    %272 = math.tanh %271 : vector<8x128xf32>
    %cst_106 = arith.constant 5.000000e-01 : f32
    %273 = vector.broadcast %cst_106 : f32 to vector<8x128xf32>
    %274 = arith.mulf %273, %272 : vector<8x128xf32>
    %cst_107 = arith.constant 5.000000e-01 : f32
    %275 = vector.broadcast %cst_107 : f32 to vector<8x128xf32>
    %276 = arith.addf %274, %275 : vector<8x128xf32>
    %277 = arith.mulf %266, %240 : vector<8x128xf32>
    %278 = arith.mulf %258, %268 : vector<8x128xf32>
    %279 = arith.addf %277, %278 : vector<8x128xf32>
    %280 = math.tanh %279 : vector<8x128xf32>
    %281 = arith.mulf %276, %280 : vector<8x128xf32>
    %c7_i32 = arith.constant 7 : i32
    %c8_i32_108 = arith.constant 8 : i32
    %282 = arith.muli %c7_i32, %c8_i32_108 : i32
    %283 = tpu.assume_multiple %282, 8 : i32
    %284 = arith.index_cast %283 : i32 to index
    %c0_109 = arith.constant 0 : index
    %285 = vector.load %arg9[%284, %c0_109] : memref<64x512xf32, #tpu.memory_space<vmem>>, vector<8x512xf32>
    %286 = arith.truncf %281 : vector<8x128xf32> to vector<8x128xbf16>
    %c0_110 = arith.constant 0 : index
    %c0_111 = arith.constant 0 : index
    %287 = vector.load %arg3[%c0_110, %c0_111] : memref<128x512xbf16, #tpu.memory_space<vmem>>, vector<128x512xbf16>
    %cst_112 = arith.constant dense<0.000000e+00> : vector<8x512xf32>
    %288 = tpu.matmul %286, %287, %cst_112 {dimension_numbers = #tpu.dot_dimension_numbers<[1], [0], [0], [1], [0, 0, 1, 1], [], []>} : vector<8x128xbf16>, vector<128x512xbf16>, vector<8x512xf32> -> vector<8x512xf32>
    %289 = arith.addf %285, %288 : vector<8x512xf32>
    %290 = vector.extract_strided_slice %289 {offsets = [0, 0], sizes = [8, 128], strides = [1, 1]} : vector<8x512xf32> to vector<8x128xf32>
    %cst_113 = arith.constant 5.000000e-01 : f32
    %291 = vector.broadcast %cst_113 : f32 to vector<8x128xf32>
    %292 = arith.mulf %291, %290 : vector<8x128xf32>
    %293 = math.tanh %292 : vector<8x128xf32>
    %cst_114 = arith.constant 5.000000e-01 : f32
    %294 = vector.broadcast %cst_114 : f32 to vector<8x128xf32>
    %295 = arith.mulf %294, %293 : vector<8x128xf32>
    %cst_115 = arith.constant 5.000000e-01 : f32
    %296 = vector.broadcast %cst_115 : f32 to vector<8x128xf32>
    %297 = arith.addf %295, %296 : vector<8x128xf32>
    %298 = vector.extract_strided_slice %289 {offsets = [0, 128], sizes = [8, 128], strides = [1, 1]} : vector<8x512xf32> to vector<8x128xf32>
    %cst_116 = arith.constant 5.000000e-01 : f32
    %299 = vector.broadcast %cst_116 : f32 to vector<8x128xf32>
    %300 = arith.mulf %299, %298 : vector<8x128xf32>
    %301 = math.tanh %300 : vector<8x128xf32>
    %cst_117 = arith.constant 5.000000e-01 : f32
    %302 = vector.broadcast %cst_117 : f32 to vector<8x128xf32>
    %303 = arith.mulf %302, %301 : vector<8x128xf32>
    %cst_118 = arith.constant 5.000000e-01 : f32
    %304 = vector.broadcast %cst_118 : f32 to vector<8x128xf32>
    %305 = arith.addf %303, %304 : vector<8x128xf32>
    %306 = vector.extract_strided_slice %289 {offsets = [0, 256], sizes = [8, 128], strides = [1, 1]} : vector<8x512xf32> to vector<8x128xf32>
    %307 = math.tanh %306 : vector<8x128xf32>
    %308 = vector.extract_strided_slice %289 {offsets = [0, 384], sizes = [8, 128], strides = [1, 1]} : vector<8x512xf32> to vector<8x128xf32>
    %cst_119 = arith.constant 5.000000e-01 : f32
    %309 = vector.broadcast %cst_119 : f32 to vector<8x128xf32>
    %310 = arith.mulf %309, %308 : vector<8x128xf32>
    %311 = math.tanh %310 : vector<8x128xf32>
    %cst_120 = arith.constant 5.000000e-01 : f32
    %312 = vector.broadcast %cst_120 : f32 to vector<8x128xf32>
    %313 = arith.mulf %312, %311 : vector<8x128xf32>
    %cst_121 = arith.constant 5.000000e-01 : f32
    %314 = vector.broadcast %cst_121 : f32 to vector<8x128xf32>
    %315 = arith.addf %313, %314 : vector<8x128xf32>
    %316 = arith.mulf %305, %279 : vector<8x128xf32>
    %317 = arith.mulf %297, %307 : vector<8x128xf32>
    %318 = arith.addf %316, %317 : vector<8x128xf32>
    %319 = math.tanh %318 : vector<8x128xf32>
    %320 = arith.mulf %315, %319 : vector<8x128xf32>
    %c8_i32_122 = arith.constant 8 : i32
    %c0_123 = arith.constant 0 : index
    %c0_124 = arith.constant 0 : index
    %321 = vector.load %arg7[%c0_123, %c0_124] : memref<8x128xf32, #tpu.memory_space<vmem>>, vector<8x128xf32>
    tpu.vector_store %arg7[%c0_123, %c0_124], %320 {strides = array<i32>} : memref<8x128xf32, #tpu.memory_space<vmem>>, vector<8x128xf32>,
    %c0_125 = arith.constant 0 : index
    %c0_126 = arith.constant 0 : index
    %322 = vector.load %arg8[%c0_125, %c0_126] : memref<8x128xf32, #tpu.memory_space<vmem>>, vector<8x128xf32>
    tpu.vector_store %arg8[%c0_125, %c0_126], %318 {strides = array<i32>} : memref<8x128xf32, #tpu.memory_space<vmem>>, vector<8x128xf32>,
    %c0_127 = arith.constant 0 : index
    %c0_128 = arith.constant 0 : index
    %323 = vector.load %arg4[%c0_127, %c0_128] : memref<128x128xf32, #tpu.memory_space<vmem>>, vector<128x128xf32>
    %cst_129 = arith.constant dense<0.000000e+00> : vector<8x128xf32>
    %324 = tpu.matmul %320, %323, %cst_129 {dimension_numbers = #tpu.dot_dimension_numbers<[1], [0], [0], [1], [0, 0, 1, 1], [], []>} : vector<8x128xf32>, vector<128x128xf32>, vector<8x128xf32> -> vector<8x128xf32>
    %c0_130 = arith.constant 0 : index
    %c0_131 = arith.constant 0 : index
    %325 = vector.load %arg5[%c0_130, %c0_131] : memref<1x128xf32, #tpu.memory_space<vmem>>, vector<1x128xf32>
    %326 = vector.broadcast %325 : vector<1x128xf32> to vector<8x128xf32>
    %327 = arith.addf %324, %326 : vector<8x128xf32>
    %c0_132 = arith.constant 0 : index
    %c0_133 = arith.constant 0 : index
    %328 = vector.load %arg6[%c0_132, %c0_133] : memref<8x128xf32, #tpu.memory_space<vmem>>, vector<8x128xf32>
    tpu.vector_store %arg6[%c0_132, %c0_133], %327 {strides = array<i32>} : memref<8x128xf32, #tpu.memory_space<vmem>>, vector<8x128xf32>,
    return
  }
  func.func @transform_0(%arg0: i32) -> (i32, i32) {
    %c0_i32 = arith.constant 0 : i32
    %c0_i32_0 = arith.constant 0 : i32
    return %arg0, %c0_i32 : i32, i32
  }
  func.func @transform_1(%arg0: i32) -> (i32, i32) {
    %c0_i32 = arith.constant 0 : i32
    %c0_i32_0 = arith.constant 0 : i32
    %c0_i32_1 = arith.constant 0 : i32
    return %c0_i32, %c0_i32_0 : i32, i32
  }
  func.func @transform_2(%arg0: i32) -> (i32, i32) {
    %c0_i32 = arith.constant 0 : i32
    %c0_i32_0 = arith.constant 0 : i32
    %c0_i32_1 = arith.constant 0 : i32
    return %c0_i32, %c0_i32_0 : i32, i32
  }
  func.func @transform_3(%arg0: i32) -> (i32, i32) {
    %c0_i32 = arith.constant 0 : i32
    %c0_i32_0 = arith.constant 0 : i32
    %c0_i32_1 = arith.constant 0 : i32
    return %c0_i32, %c0_i32_0 : i32, i32
  }
  func.func @transform_4(%arg0: i32) -> (i32, i32) {
    %c0_i32 = arith.constant 0 : i32
    %c0_i32_0 = arith.constant 0 : i32
    %c0_i32_1 = arith.constant 0 : i32
    return %c0_i32, %c0_i32_0 : i32, i32
  }
  func.func @transform_5(%arg0: i32) -> (i32, i32) {
    %c0_i32 = arith.constant 0 : i32
    %c0_i32_0 = arith.constant 0 : i32
    %c0_i32_1 = arith.constant 0 : i32
    return %c0_i32, %c0_i32_0 : i32, i32
  }
}

</mosaic_0001>

<llo_original>
// kernel: tpu_custom_call.1
$region0: #{tpu_custom_call.1}
  #allocation0 [shape = 'u32[]', space=smem, size = 0x4, offset = 0x4, fixed_abs, tag = 'smem constant byte address 0x4 - core index']
  #allocation1 [shape = 'u32[144,128]{1,0:T(1,128)}', space=vmem, size = 0x12000, scoped, tag = 'internal scratch']
  #allocation2 [shape = 'f32[8,128]{1,0:T(8,128)}', space=vmem, size = 0x1000, scoped, tag = 'scratch operand']
  #allocation3 [shape = 'f32[8,128]{1,0:T(8,128)}', space=vmem, size = 0x1000, scoped, tag = 'scratch operand']
  #allocation4 [shape = 'f32[64,512]{1,0:T(8,128)}', space=vmem, size = 0x20000, scoped, tag = 'scratch operand']
  %s0 = inlined_call_operand.hbm [shape: bf16[64,128], index: 0, kind: input, shape index: {}]
  %s1 = inlined_call_operand.hbm [shape: bf16[128,512], index: 1, kind: input, shape index: {}]
  %s2 = inlined_call_operand.hbm [shape: bf16[128,512], index: 2, kind: input, shape index: {}]
  %s3 = inlined_call_operand.hbm [shape: f32[128,128], index: 3, kind: input, shape index: {}]
  %s4 = inlined_call_operand.vmem [shape: f32[1,128], index: 4, kind: input, shape index: {}]
  %s5 = inlined_call_operand.hbm [shape: f32[8,128], index: 5, kind: output, shape index: {}]
  %s6 = sld [smem:[#allocation0]]
  $region50: #{tpu_custom_call.1} parent=0
    _
  %s8 = ssub.s32 1, %s6
  %s9 = scalar_select 0, %s8, %s6
  $region1: #{tpu_custom_call.1} parent=0
    #allocation5 [shape = 'u8[16384]{0}', space=vmem, size = 0x4000, scoped, tag = 'input window, operand 0, single buffered']
    #allocation6 [shape = 's32[1]{0}', space=sflag, size = 0x4, scoped, tag = 'scoped memory for tpu_custom_call.1']
    #allocation7 [shape = 's32[1]{0}', space=sflag, size = 0x4, scoped, tag = 'scoped memory for tpu_custom_call.1']
    #allocation8 [shape = 'u8[131072]{0}', space=vmem, size = 0x20000, scoped, tag = 'input window, operand 1, single buffered']
    #allocation9 [shape = 's32[1]{0}', space=sflag, size = 0x4, scoped, tag = 'scoped memory for tpu_custom_call.1']
    #allocation10 [shape = 'u8[131072]{0}', space=vmem, size = 0x20000, scoped, tag = 'input window, operand 2, single buffered']
    #allocation11 [shape = 'u8[65536]{0}', space=vmem, size = 0x10000, scoped, tag = 'input window, operand 3, single buffered']
    #allocation12 [shape = 's32[1]{0}', space=sflag, size = 0x4, scoped, tag = 'scoped memory for tpu_custom_call.1']
    #allocation13 [shape = 'u8[4096]{0}', space=vmem, size = 0x1000, scoped, tag = 'output window, operand 0, single buffered']
    %10 = vsyncpa [#allocation6], 0
    %11 = vsyncpa [#allocation9], 0
    %12 = vsyncpa [#allocation12], 0
    %13 = vsyncpa [#allocation7], 0
    // Predicated region
    $region2: #{tpu_custom_call.1} parent=1 // pred_check
      _
    $region3: #{tpu_custom_call.1} parent=1 // pred_check_branch
      %15 = sbr.rel (0) target = $region5
    $region4: #{tpu_custom_call.1} parent=1 // pred_region
      %s17 = ssub.s32 512, 512
      %18 = vsyncadd [#allocation6], %s17
      %s19 = sshll.u32 [#allocation5], 4
      %s20 = int_to_ptr.vmem [resolvable:$true] %s19
      %25 = dma.hbm_to_vmem [thread:$0]  %s0, 512, %s20, [#allocation6], 64, 64, 4
    $region5: #{tpu_custom_call.1} parent=1 // pred_fallthru
      _
    // Predicated region
    $region6: #{tpu_custom_call.1} parent=1 // pred_check
      _
    $region7: #{tpu_custom_call.1} parent=1 // pred_check_branch
      %27 = sbr.rel (0) target = $region9
    $region8: #{tpu_custom_call.1} parent=1 // pred_region
      %s29 = ssub.s32 4096, 4096
      %30 = vsyncadd [#allocation9], %s29
      %s31 = sshll.u32 [#allocation8], 4
      %s32 = int_to_ptr.vmem [resolvable:$true] %s31
      %37 = dma.hbm_to_vmem [thread:$0]  %s1, 4096, %s32, [#allocation9], 256, 256, 16
    $region9: #{tpu_custom_call.1} parent=1 // pred_fallthru
      _
    // Predicated region
    $region10: #{tpu_custom_call.1} parent=1 // pred_check
      _
    $region11: #{tpu_custom_call.1} parent=1 // pred_check_branch
      %39 = sbr.rel (0) target = $region13
    $region12: #{tpu_custom_call.1} parent=1 // pred_region
      %s41 = ssub.s32 4096, 4096
      %42 = vsyncadd [#allocation9], %s41
      %s43 = sshll.u32 [#allocation10], 4
      %s44 = int_to_ptr.vmem [resolvable:$true] %s43
      %49 = dma.hbm_to_vmem [thread:$0]  %s2, 4096, %s44, [#allocation9], 256, 256, 16
    $region13: #{tpu_custom_call.1} parent=1 // pred_fallthru
      _
    // Predicated region
    $region14: #{tpu_custom_call.1} parent=1 // pred_check
      _
    $region15: #{tpu_custom_call.1} parent=1 // pred_check_branch
      %51 = sbr.rel (0) target = $region17
    $region16: #{tpu_custom_call.1} parent=1 // pred_region
      %s53 = ssub.s32 2048, 2048
      %54 = vsyncadd [#allocation12], %s53
      %s55 = sshll.u32 [#allocation11], 4
      %s56 = int_to_ptr.vmem [resolvable:$true] %s55
      %61 = dma.hbm_to_vmem [thread:$0]  %s3, 2048, %s56, [#allocation12], 128, 128, 8
    $region17: #{tpu_custom_call.1} parent=1 // pred_fallthru
      _
    // Predicated region
    $region18: #{tpu_custom_call.1} parent=1 // pred_check
      _
    $region19: #{tpu_custom_call.1} parent=1 // pred_check_branch
      %63 = sbr.rel (0) target = $region21
    $region20: #{tpu_custom_call.1} parent=1 // pred_region
      _
    $region21: #{tpu_custom_call.1} parent=1 // pred_fallthru
      _
    // Predicated region
    $region22: #{tpu_custom_call.1} parent=1 // pred_check
      _
    $region23: #{tpu_custom_call.1} parent=1 // pred_check_branch
      %65 = sbr.rel (0) target = $region25
    $region24: #{tpu_custom_call.1} parent=1 // pred_region
      %66 = dma.done [#allocation6], 512
    $region25: #{tpu_custom_call.1} parent=1 // pred_fallthru
      _
    // Predicated region
    $region26: #{tpu_custom_call.1} parent=1 // pred_check
      _
    $region27: #{tpu_custom_call.1} parent=1 // pred_check_branch
      %68 = sbr.rel (0) target = $region29
    $region28: #{tpu_custom_call.1} parent=1 // pred_region
      %69 = dma.done [#allocation9], 4096
    $region29: #{tpu_custom_call.1} parent=1 // pred_fallthru
      _
    // Predicated region
    $region30: #{tpu_custom_call.1} parent=1 // pred_check
      _
    $region31: #{tpu_custom_call.1} parent=1 // pred_check_branch
      %71 = sbr.rel (0) target = $region33
    $region32: #{tpu_custom_call.1} parent=1 // pred_region
      %72 = dma.done [#allocation9], 4096
    $region33: #{tpu_custom_call.1} parent=1 // pred_fallthru
      _
    // Predicated region
    $region34: #{tpu_custom_call.1} parent=1 // pred_check
      _
    $region35: #{tpu_custom_call.1} parent=1 // pred_check_branch
      %74 = sbr.rel (0) target = $region37
    $region36: #{tpu_custom_call.1} parent=1 // pred_region
      %75 = dma.done [#allocation12], 2048
    $region37: #{tpu_custom_call.1} parent=1 // pred_fallthru
      _
    %p77 = scmp.eq.s32.totalorder 0, 0
    // Predicated region
    $region38: #{tpu_custom_call.1} parent=1 // pred_check
      %p78 = pneg %p77
    $region39: #{tpu_custom_call.1} parent=1 // pred_check_branch
      %80 = sbr.rel (%p78) target = $region41
    $region40: #{tpu_custom_call.1} parent=1 // pred_region
      %81 = vst [vmem:[#allocation2] sm:$0xff] 0.0
      %82 = vst [vmem:[#allocation3] sm:$0xff] 0.0
    $region41: #{tpu_custom_call.1} parent=1 // pred_fallthru
      _
    %v83 = vld [vmem:[#allocation5] sm:$0xf]
    %v84 = vld [vmem:[#allocation5 + $0x4] sm:$0xf]
    %v85 = vld [vmem:[#allocation5 + $0x8] sm:$0xf]
    %v86 = vld [vmem:[#allocation5 + $0xc] sm:$0xf]
    %v87 = vld [vmem:[#allocation5 + $0x10] sm:$0xf]
    %v88 = vld [vmem:[#allocation5 + $0x14] sm:$0xf]
    %v89 = vld [vmem:[#allocation5 + $0x18] sm:$0xf]
    %v90 = vld [vmem:[#allocation5 + $0x1c] sm:$0xf]
    %v91 = vld [vmem:[#allocation8] sm:$0xff]
    %v92 = vld [vmem:[#allocation8 + $0x8] sm:$0xff]
    %v93 = vld [vmem:[#allocation8 + $0x10] sm:$0xff]
    %v94 = vld [vmem:[#allocation8 + $0x18] sm:$0xff]
    %v95 = vld [vmem:[#allocation8 + $0x20] sm:$0xff]
    %v96 = vld [vmem:[#allocation8 + $0x28] sm:$0xff]
    %v97 = vld [vmem:[#allocation8 + $0x30] sm:$0xff]
    %v98 = vld [vmem:[#allocation8 + $0x38] sm:$0xff]
    %v99 = vld [vmem:[#allocation8 + $0x40] sm:$0xff]
    %v100 = vld [vmem:[#allocation8 + $0x48] sm:$0xff]
    %v101 = vld [vmem:[#allocation8 + $0x50] sm:$0xff]
    %v102 = vld [vmem:[#allocation8 + $0x58] sm:$0xff]
    %v103 = vld [vmem:[#allocation8 + $0x60] sm:$0xff]
    %v104 = vld [vmem:[#allocation8 + $0x68] sm:$0xff]
    %v105 = vld [vmem:[#allocation8 + $0x70] sm:$0xff]
    %v106 = vld [vmem:[#allocation8 + $0x78] sm:$0xff]
    %v107 = vld [vmem:[#allocation8 + $0x80] sm:$0xff]
    %v108 = vld [vmem:[#allocation8 + $0x88] sm:$0xff]
    %v109 = vld [vmem:[#allocation8 + $0x90] sm:$0xff]
    %v110 = vld [vmem:[#allocation8 + $0x98] sm:$0xff]
    %v111 = vld [vmem:[#allocation8 + $0xa0] sm:$0xff]
    %v112 = vld [vmem:[#allocation8 + $0xa8] sm:$0xff]
    %v113 = vld [vmem:[#allocation8 + $0xb0] sm:$0xff]
    %v114 = vld [vmem:[#allocation8 + $0xb8] sm:$0xff]
    %v115 = vld [vmem:[#allocation8 + $0xc0] sm:$0xff]
    %v116 = vld [vmem:[#allocation8 + $0xc8] sm:$0xff]
    %v117 = vld [vmem:[#allocation8 + $0xd0] sm:$0xff]
    %v118 = vld [vmem:[#allocation8 + $0xd8] sm:$0xff]
    %v119 = vld [vmem:[#allocation8 + $0xe0] sm:$0xff]
    %v120 = vld [vmem:[#allocation8 + $0xe8] sm:$0xff]
    %v121 = vld [vmem:[#allocation8 + $0xf0] sm:$0xff]
    %v122 = vld [vmem:[#allocation8 + $0xf8] sm:$0xff]
    %v131 = vunpack.c.l.b16 %v83
    %v132 = vunpack.c.l.b16 %v84
    %v133 = vunpack.c.l.b16 %v85
    %v134 = vunpack.c.l.b16 %v86
    %v135 = vunpack.c.l.b16 %v87
    %v136 = vunpack.c.l.b16 %v88
    %v137 = vunpack.c.l.b16 %v89
    %v138 = vunpack.c.l.b16 %v90
    %v139 = vpack.c.b16 %v132, %v131
    %v140 = vpack.c.b16 %v134, %v133
    %v141 = vpack.c.b16 %v136, %v135
    %v142 = vpack.c.b16 %v138, %v137
    %v179 = vunpack.c.l.b16 %v91
    %v180 = vunpack.c.h.b16 %v91
    %v181 = vunpack.c.l.b16 %v92
    %v182 = vunpack.c.h.b16 %v92
    %v183 = vunpack.c.l.b16 %v93
    %v184 = vunpack.c.h.b16 %v93
    %v185 = vunpack.c.l.b16 %v94
    %v186 = vunpack.c.h.b16 %v94
    %v187 = vunpack.c.l.b16 %v95
    %v188 = vunpack.c.h.b16 %v95
    %v189 = vunpack.c.l.b16 %v96
    %v190 = vunpack.c.h.b16 %v96
    %v191 = vunpack.c.l.b16 %v97
    %v192 = vunpack.c.h.b16 %v97
    %v193 = vunpack.c.l.b16 %v98
    %v194 = vunpack.c.h.b16 %v98
    %v195 = vunpack.c.l.b16 %v99
    %v196 = vunpack.c.h.b16 %v99
    %v197 = vunpack.c.l.b16 %v100
    %v198 = vunpack.c.h.b16 %v100
    %v199 = vunpack.c.l.b16 %v101
    %v200 = vunpack.c.h.b16 %v101
    %v201 = vunpack.c.l.b16 %v102
    %v202 = vunpack.c.h.b16 %v102
    %v203 = vunpack.c.l.b16 %v103
    %v204 = vunpack.c.h.b16 %v103
    %v205 = vunpack.c.l.b16 %v104
    %v206 = vunpack.c.h.b16 %v104
    %v207 = vunpack.c.l.b16 %v105
    %v208 = vunpack.c.h.b16 %v105
    %v209 = vunpack.c.l.b16 %v106
    %v210 = vunpack.c.h.b16 %v106
    %v211 = vunpack.c.l.b16 %v107
    %v212 = vunpack.c.h.b16 %v107
    %v213 = vunpack.c.l.b16 %v108
    %v214 = vunpack.c.h.b16 %v108
    %v215 = vunpack.c.l.b16 %v109
    %v216 = vunpack.c.h.b16 %v109
    %v217 = vunpack.c.l.b16 %v110
    %v218 = vunpack.c.h.b16 %v110
    %v219 = vunpack.c.l.b16 %v111
    %v220 = vunpack.c.h.b16 %v111
    %v221 = vunpack.c.l.b16 %v112
    %v222 = vunpack.c.h.b16 %v112
    %v223 = vunpack.c.l.b16 %v113
    %v224 = vunpack.c.h.b16 %v113
    %v225 = vunpack.c.l.b16 %v114
    %v226 = vunpack.c.h.b16 %v114
    %v227 = vunpack.c.l.b16 %v115
    %v228 = vunpack.c.h.b16 %v115
    %v229 = vunpack.c.l.b16 %v116
    %v230 = vunpack.c.h.b16 %v116
    %v231 = vunpack.c.l.b16 %v117
    %v232 = vunpack.c.h.b16 %v117
    %v233 = vunpack.c.l.b16 %v118
    %v234 = vunpack.c.h.b16 %v118
    %v235 = vunpack.c.l.b16 %v119
    %v236 = vunpack.c.h.b16 %v119
    %v237 = vunpack.c.l.b16 %v120
    %v238 = vunpack.c.h.b16 %v120
    %v239 = vunpack.c.l.b16 %v121
    %v240 = vunpack.c.h.b16 %v121
    %v241 = vunpack.c.l.b16 %v122
    %v242 = vunpack.c.h.b16 %v122
    %v243 = vpack.c.b16 %v183, %v179
    %v244 = vpack.c.b16 %v184, %v180
    %v245 = vpack.c.b16 %v185, %v181
    %v246 = vpack.c.b16 %v186, %v182
    %v247 = vpack.c.b16 %v191, %v187
    %v248 = vpack.c.b16 %v192, %v188
    %v249 = vpack.c.b16 %v193, %v189
    %v250 = vpack.c.b16 %v194, %v190
    %v251 = vpack.c.b16 %v199, %v195
    %v252 = vpack.c.b16 %v200, %v196
    %v253 = vpack.c.b16 %v201, %v197
    %v254 = vpack.c.b16 %v202, %v198
    %v255 = vpack.c.b16 %v207, %v203
    %v256 = vpack.c.b16 %v208, %v204
    %v257 = vpack.c.b16 %v209, %v205
    %v258 = vpack.c.b16 %v210, %v206
    %v259 = vpack.c.b16 %v215, %v211
    %v260 = vpack.c.b16 %v216, %v212
    %v261 = vpack.c.b16 %v217, %v213
    %v262 = vpack.c.b16 %v218, %v214
    %v263 = vpack.c.b16 %v223, %v219
    %v264 = vpack.c.b16 %v224, %v220
    %v265 = vpack.c.b16 %v225, %v221
    %v266 = vpack.c.b16 %v226, %v222
    %v267 = vpack.c.b16 %v231, %v227
    %v268 = vpack.c.b16 %v232, %v228
    %v269 = vpack.c.b16 %v233, %v229
    %v270 = vpack.c.b16 %v234, %v230
    %v271 = vpack.c.b16 %v239, %v235
    %v272 = vpack.c.b16 %v240, %v236
    %v273 = vpack.c.b16 %v241, %v237
    %v274 = vpack.c.b16 %v242, %v238
    %307 = vmatprep.subr.bf16.mxu0 %v272
    %308 = vmatpush1.bf16.msra.mxu0 %v271
    %309 = vmatprep.subr.bf16.mxu0 %v268
    %310 = vmatpush1.bf16.msra.mxu0 %v267
    %311 = vmatprep.subr.bf16.mxu0 %v264
    %312 = vmatpush1.bf16.msra.mxu0 %v263
    %313 = vmatprep.subr.bf16.mxu0 %v260
    %314 = vmatpush1.bf16.msra.mxu0 %v259
    %315 = vmatprep.subr.bf16.mxu0 %v256
    %316 = vmatpush1.bf16.msra.mxu0 %v255
    %317 = vmatprep.subr.bf16.mxu0 %v252
    %318 = vmatpush1.bf16.msra.mxu0 %v251
    %319 = vmatprep.subr.bf16.mxu0 %v248
    %320 = vmatpush1.bf16.msra.mxu0 %v247
    %321 = vmatprep.subr.bf16.mxu0 %v244
    %322 = vmatpush1.bf16.msra.mxu0 %v243
    %323 = vmatprep.subr.bf16.mxu0 0
    %324 = vmatpush2.bf16.msra.mxu0 0
    %325 = vmatprep.subr.bf16.mxu0 0
    %326 = vmatpush2.bf16.msra.mxu0 0
    %327 = vmatprep.subr.bf16.mxu0 0
    %328 = vmatpush2.bf16.msra.mxu0 0
    %329 = vmatprep.subr.bf16.mxu0 0
    %330 = vmatpush2.bf16.msra.mxu0 0
    %331 = vmatprep.subr.bf16.mxu0 0
    %332 = vmatpush2.bf16.msra.mxu0 0
    %333 = vmatprep.subr.bf16.mxu0 0
    %334 = vmatpush2.bf16.msra.mxu0 0
    %335 = vmatprep.subr.bf16.mxu0 0
    %336 = vmatpush2.bf16.msra.mxu0 0
    %337 = vmatprep.subr.bf16.mxu0 0
    %338 = vmatpush2.bf16.msra.mxu0 0
    %339 = vmatprep.mubr.bf16.mxu0 0
    %340 = vmatmul.mubr.bf16.gmra.mxu0 %v139
    %v341 = vpop.f32.mrf.mxu0
    %v342 = vadd.f32 0.0, %v341
    %v343 = vpop.f32.mrf.mxu0
    %v344 = vadd.f32 0.0, %v343
    %v345 = vpop.f32.mrf.mxu0
    %v346 = vadd.f32 0.0, %v345
    %v347 = vpop.f32.mrf.mxu0
    %v348 = vadd.f32 0.0, %v347
    %349 = vmatprep.mubr.bf16.mxu0 0
    %350 = vmatmul.mubr.bf16.gmra.mxu0 %v140
    %v351 = vpop.f32.mrf.mxu0
    %v352 = vadd.f32 0.0, %v351
    %v353 = vpop.f32.mrf.mxu0
    %v354 = vadd.f32 0.0, %v353
    %v355 = vpop.f32.mrf.mxu0
    %v356 = vadd.f32 0.0, %v355
    %v357 = vpop.f32.mrf.mxu0
    %v358 = vadd.f32 0.0, %v357
    %359 = vmatprep.mubr.bf16.mxu0 0
    %360 = vmatmul.mubr.bf16.gmra.mxu0 %v141
    %v361 = vpop.f32.mrf.mxu0
    %v362 = vadd.f32 0.0, %v361
    %v363 = vpop.f32.mrf.mxu0
    %v364 = vadd.f32 0.0, %v363
    %v365 = vpop.f32.mrf.mxu0
    %v366 = vadd.f32 0.0, %v365
    %v367 = vpop.f32.mrf.mxu0
    %v368 = vadd.f32 0.0, %v367
    %369 = vmatprep.mubr.bf16.mxu0 0
    %370 = vmatmul.mubr.bf16.gmra.mxu0 %v142
    %v371 = vpop.f32.mrf.mxu0
    %v372 = vadd.f32 0.0, %v371
    %v373 = vpop.f32.mrf.mxu0
    %v374 = vadd.f32 0.0, %v373
    %v375 = vpop.f32.mrf.mxu0
    %v376 = vadd.f32 0.0, %v375
    %v377 = vpop.f32.mrf.mxu0
    %v378 = vadd.f32 0.0, %v377
    %379 = vdwg.mxu0
    %380 = vmatprep.subr.bf16.mxu0 %v274
    %381 = vmatpush1.bf16.msra.mxu0 %v273
    %382 = vmatprep.subr.bf16.mxu0 %v270
    %383 = vmatpush1.bf16.msra.mxu0 %v269
    %384 = vmatprep.subr.bf16.mxu0 %v266
    %385 = vmatpush1.bf16.msra.mxu0 %v265
    %386 = vmatprep.subr.bf16.mxu0 %v262
    %387 = vmatpush1.bf16.msra.mxu0 %v261
    %388 = vmatprep.subr.bf16.mxu0 %v258
    %389 = vmatpush1.bf16.msra.mxu0 %v257
    %390 = vmatprep.subr.bf16.mxu0 %v254
    %391 = vmatpush1.bf16.msra.mxu0 %v253
    %392 = vmatprep.subr.bf16.mxu0 %v250
    %393 = vmatpush1.bf16.msra.mxu0 %v249
    %394 = vmatprep.subr.bf16.mxu0 %v246
    %395 = vmatpush1.bf16.msra.mxu0 %v245
    %396 = vmatprep.subr.bf16.mxu0 0
    %397 = vmatpush2.bf16.msra.mxu0 0
    %398 = vmatprep.subr.bf16.mxu0 0
    %399 = vmatpush2.bf16.msra.mxu0 0
    %400 = vmatprep.subr.bf16.mxu0 0
    %401 = vmatpush2.bf16.msra.mxu0 0
    %402 = vmatprep.subr.bf16.mxu0 0
    %403 = vmatpush2.bf16.msra.mxu0 0
    %404 = vmatprep.subr.bf16.mxu0 0
    %405 = vmatpush2.bf16.msra.mxu0 0
    %406 = vmatprep.subr.bf16.mxu0 0
    %407 = vmatpush2.bf16.msra.mxu0 0
    %408 = vmatprep.subr.bf16.mxu0 0
    %409 = vmatpush2.bf16.msra.mxu0 0
    %410 = vmatprep.subr.bf16.mxu0 0
    %411 = vmatpush2.bf16.msra.mxu0 0
    %412 = vmatprep.mubr.bf16.mxu0 0
    %413 = vmatmul.mubr.bf16.gmra.mxu0 %v139
    %v414 = vpop.f32.mrf.mxu0
    %v415 = vadd.f32 0.0, %v414
    %v416 = vpop.f32.mrf.mxu0
    %v417 = vadd.f32 0.0, %v416
    %v418 = vpop.f32.mrf.mxu0
    %v419 = vadd.f32 0.0, %v418
    %v420 = vpop.f32.mrf.mxu0
    %v421 = vadd.f32 0.0, %v420
    %422 = vmatprep.mubr.bf16.mxu0 0
    %423 = vmatmul.mubr.bf16.gmra.mxu0 %v140
    %v424 = vpop.f32.mrf.mxu0
    %v425 = vadd.f32 0.0, %v424
    %v426 = vpop.f32.mrf.mxu0
    %v427 = vadd.f32 0.0, %v426
    %v428 = vpop.f32.mrf.mxu0
    %v429 = vadd.f32 0.0, %v428
    %v430 = vpop.f32.mrf.mxu0
    %v431 = vadd.f32 0.0, %v430
    %432 = vmatprep.mubr.bf16.mxu0 0
    %433 = vmatmul.mubr.bf16.gmra.mxu0 %v141
    %v434 = vpop.f32.mrf.mxu0
    %v435 = vadd.f32 0.0, %v434
    %v436 = vpop.f32.mrf.mxu0
    %v437 = vadd.f32 0.0, %v436
    %v438 = vpop.f32.mrf.mxu0
    %v439 = vadd.f32 0.0, %v438
    %v440 = vpop.f32.mrf.mxu0
    %v441 = vadd.f32 0.0, %v440
    %442 = vmatprep.mubr.bf16.mxu0 0
    %443 = vmatmul.mubr.bf16.gmra.mxu0 %v142
    %v444 = vpop.f32.mrf.mxu0
    %v445 = vadd.f32 0.0, %v444
    %v446 = vpop.f32.mrf.mxu0
    %v447 = vadd.f32 0.0, %v446
    %v448 = vpop.f32.mrf.mxu0
    %v449 = vadd.f32 0.0, %v448
    %v450 = vpop.f32.mrf.mxu0
    %v451 = vadd.f32 0.0, %v450
    %452 = vdwg.mxu0
    %453 = vst [vmem:[#allocation4] sm:$0xff] %v342
    %454 = vst [vmem:[#allocation4 + $0x8] sm:$0xff] %v344
    %455 = vst [vmem:[#allocation4 + $0x10] sm:$0xff] %v415
    %456 = vst [vmem:[#allocation4 + $0x18] sm:$0xff] %v417
    %457 = vst [vmem:[#allocation4 + $0x20] sm:$0xff] %v346
    %458 = vst [vmem:[#allocation4 + $0x28] sm:$0xff] %v348
    %459 = vst [vmem:[#allocation4 + $0x30] sm:$0xff] %v419
    %460 = vst [vmem:[#allocation4 + $0x38] sm:$0xff] %v421
    %461 = vst [vmem:[#allocation4 + $0x40] sm:$0xff] %v352
    %462 = vst [vmem:[#allocation4 + $0x48] sm:$0xff] %v354
    %463 = vst [vmem:[#allocation4 + $0x50] sm:$0xff] %v425
    %464 = vst [vmem:[#allocation4 + $0x58] sm:$0xff] %v427
    %465 = vst [vmem:[#allocation4 + $0x60] sm:$0xff] %v356
    %466 = vst [vmem:[#allocation4 + $0x68] sm:$0xff] %v358
    %467 = vst [vmem:[#allocation4 + $0x70] sm:$0xff] %v429
    %468 = vst [vmem:[#allocation4 + $0x78] sm:$0xff] %v431
    %469 = vst [vmem:[#allocation4 + $0x80] sm:$0xff] %v362
    %470 = vst [vmem:[#allocation4 + $0x88] sm:$0xff] %v364
    %471 = vst [vmem:[#allocation4 + $0x90] sm:$0xff] %v435
    %472 = vst [vmem:[#allocation4 + $0x98] sm:$0xff] %v437
    %473 = vst [vmem:[#allocation4 + $0xa0] sm:$0xff] %v366
    %474 = vst [vmem:[#allocation4 + $0xa8] sm:$0xff] %v368
    %475 = vst [vmem:[#allocation4 + $0xb0] sm:$0xff] %v439
    %476 = vst [vmem:[#allocation4 + $0xb8] sm:$0xff] %v441
    %477 = vst [vmem:[#allocation4 + $0xc0] sm:$0xff] %v372
    %478 = vst [vmem:[#allocation4 + $0xc8] sm:$0xff] %v374
    %479 = vst [vmem:[#allocation4 + $0xd0] sm:$0xff] %v445
    %480 = vst [vmem:[#allocation4 + $0xd8] sm:$0xff] %v447
    %481 = vst [vmem:[#allocation4 + $0xe0] sm:$0xff] %v376
    %482 = vst [vmem:[#allocation4 + $0xe8] sm:$0xff] %v378
    %483 = vst [vmem:[#allocation4 + $0xf0] sm:$0xff] %v449
    %484 = vst [vmem:[#allocation4 + $0xf8] sm:$0xff] %v451
    %v485 = vld [vmem:[#allocation2] sm:$0xff]
    %v486 = vld [vmem:[#allocation3] sm:$0xff]
    %s487 = smul.u32 0, 4
    %s488 = smul.addr %s487, 8
    %s489 = scalar_lea.vmem [#allocation4], %s488
    %v490 = vld [vmem:[%s489] sm:$0xff]
    %v491 = vld [vmem:[%s489 + $0x8] sm:$0xff]
    %v492 = vld [vmem:[%s489 + $0x10] sm:$0xff]
    %v493 = vld [vmem:[%s489 + $0x18] sm:$0xff]
    %v494 = vpack.c.bf16 %v485, %v485
    %v495 = vld [vmem:[#allocation10] sm:$0xff]
    %v496 = vld [vmem:[#allocation10 + $0x8] sm:$0xff]
    %v497 = vld [vmem:[#allocation10 + $0x10] sm:$0xff]
    %v498 = vld [vmem:[#allocation10 + $0x18] sm:$0xff]
    %v499 = vld [vmem:[#allocation10 + $0x20] sm:$0xff]
    %v500 = vld [vmem:[#allocation10 + $0x28] sm:$0xff]
    %v501 = vld [vmem:[#allocation10 + $0x30] sm:$0xff]
    %v502 = vld [vmem:[#allocation10 + $0x38] sm:$0xff]
    %v503 = vld [vmem:[#allocation10 + $0x40] sm:$0xff]
    %v504 = vld [vmem:[#allocation10 + $0x48] sm:$0xff]
    %v505 = vld [vmem:[#allocation10 + $0x50] sm:$0xff]
    %v506 = vld [vmem:[#allocation10 + $0x58] sm:$0xff]
    %v507 = vld [vmem:[#allocation10 + $0x60] sm:$0xff]
    %v508 = vld [vmem:[#allocation10 + $0x68] sm:$0xff]
    %v509 = vld [vmem:[#allocation10 + $0x70] sm:$0xff]
    %v510 = vld [vmem:[#allocation10 + $0x78] sm:$0xff]
    %v511 = vld [vmem:[#allocation10 + $0x80] sm:$0xff]
    %v512 = vld [vmem:[#allocation10 + $0x88] sm:$0xff]
    %v513 = vld [vmem:[#allocation10 + $0x90] sm:$0xff]
    %v514 = vld [vmem:[#allocation10 + $0x98] sm:$0xff]
    %v515 = vld [vmem:[#allocation10 + $0xa0] sm:$0xff]
    %v516 = vld [vmem:[#allocation10 + $0xa8] sm:$0xff]
    %v517 = vld [vmem:[#allocation10 + $0xb0] sm:$0xff]
    %v518 = vld [vmem:[#allocation10 + $0xb8] sm:$0xff]
    %v519 = vld [vmem:[#allocation10 + $0xc0] sm:$0xff]
    %v520 = vld [vmem:[#allocation10 + $0xc8] sm:$0xff]
    %v521 = vld [vmem:[#allocation10 + $0xd0] sm:$0xff]
    %v522 = vld [vmem:[#allocation10 + $0xd8] sm:$0xff]
    %v523 = vld [vmem:[#allocation10 + $0xe0] sm:$0xff]
    %v524 = vld [vmem:[#allocation10 + $0xe8] sm:$0xff]
    %v525 = vld [vmem:[#allocation10 + $0xf0] sm:$0xff]
    %v526 = vld [vmem:[#allocation10 + $0xf8] sm:$0xff]
    %v559 = vunpack.c.l.b16 %v495
    %v560 = vunpack.c.h.b16 %v495
    %v561 = vunpack.c.l.b16 %v496
    %v562 = vunpack.c.h.b16 %v496
    %v563 = vunpack.c.l.b16 %v497
    %v564 = vunpack.c.h.b16 %v497
    %v565 = vunpack.c.l.b16 %v498
    %v566 = vunpack.c.h.b16 %v498
    %v567 = vunpack.c.l.b16 %v499
    %v568 = vunpack.c.h.b16 %v499
    %v569 = vunpack.c.l.b16 %v500
    %v570 = vunpack.c.h.b16 %v500
    %v571 = vunpack.c.l.b16 %v501
    %v572 = vunpack.c.h.b16 %v501
    %v573 = vunpack.c.l.b16 %v502
    %v574 = vunpack.c.h.b16 %v502
    %v575 = vunpack.c.l.b16 %v503
    %v576 = vunpack.c.h.b16 %v503
    %v577 = vunpack.c.l.b16 %v504
    %v578 = vunpack.c.h.b16 %v504
    %v579 = vunpack.c.l.b16 %v505
    %v580 = vunpack.c.h.b16 %v505
    %v581 = vunpack.c.l.b16 %v506
    %v582 = vunpack.c.h.b16 %v506
    %v583 = vunpack.c.l.b16 %v507
    %v584 = vunpack.c.h.b16 %v507
    %v585 = vunpack.c.l.b16 %v508
    %v586 = vunpack.c.h.b16 %v508
    %v587 = vunpack.c.l.b16 %v509
    %v588 = vunpack.c.h.b16 %v509
    %v589 = vunpack.c.l.b16 %v510
    %v590 = vunpack.c.h.b16 %v510
    %v591 = vunpack.c.l.b16 %v511
    %v592 = vunpack.c.h.b16 %v511
    %v593 = vunpack.c.l.b16 %v512
    %v594 = vunpack.c.h.b16 %v512
    %v595 = vunpack.c.l.b16 %v513
    %v596 = vunpack.c.h.b16 %v513
    %v597 = vunpack.c.l.b16 %v514
    %v598 = vunpack.c.h.b16 %v514
    %v599 = vunpack.c.l.b16 %v515
    %v600 = vunpack.c.h.b16 %v515
    %v601 = vunpack.c.l.b16 %v516
    %v602 = vunpack.c.h.b16 %v516
    %v603 = vunpack.c.l.b16 %v517
    %v604 = vunpack.c.h.b16 %v517
    %v605 = vunpack.c.l.b16 %v518
    %v606 = vunpack.c.h.b16 %v518
    %v607 = vunpack.c.l.b16 %v519
    %v608 = vunpack.c.h.b16 %v519
    %v609 = vunpack.c.l.b16 %v520
    %v610 = vunpack.c.h.b16 %v520
    %v611 = vunpack.c.l.b16 %v521
    %v612 = vunpack.c.h.b16 %v521
    %v613 = vunpack.c.l.b16 %v522
    %v614 = vunpack.c.h.b16 %v522
    %v615 = vunpack.c.l.b16 %v523
    %v616 = vunpack.c.h.b16 %v523
    %v617 = vunpack.c.l.b16 %v524
    %v618 = vunpack.c.h.b16 %v524
    %v619 = vunpack.c.l.b16 %v525
    %v620 = vunpack.c.h.b16 %v525
    %v621 = vunpack.c.l.b16 %v526
    %v622 = vunpack.c.h.b16 %v526
    %v623 = vpack.c.b16 %v563, %v559
    %v624 = vpack.c.b16 %v564, %v560
    %v625 = vpack.c.b16 %v565, %v561
    %v626 = vpack.c.b16 %v566, %v562
    %v627 = vpack.c.b16 %v571, %v567
    %v628 = vpack.c.b16 %v572, %v568
    %v629 = vpack.c.b16 %v573, %v569
    %v630 = vpack.c.b16 %v574, %v570
    %v631 = vpack.c.b16 %v579, %v575
    %v632 = vpack.c.b16 %v580, %v576
    %v633 = vpack.c.b16 %v581, %v577
    %v634 = vpack.c.b16 %v582, %v578
    %v635 = vpack.c.b16 %v587, %v583
    %v636 = vpack.c.b16 %v588, %v584
    %v637 = vpack.c.b16 %v589, %v585
    %v638 = vpack.c.b16 %v590, %v586
    %v639 = vpack.c.b16 %v595, %v591
    %v640 = vpack.c.b16 %v596, %v592
    %v641 = vpack.c.b16 %v597, %v593
    %v642 = vpack.c.b16 %v598, %v594
    %v643 = vpack.c.b16 %v603, %v599
    %v644 = vpack.c.b16 %v604, %v600
    %v645 = vpack.c.b16 %v605, %v601
    %v646 = vpack.c.b16 %v606, %v602
    %v647 = vpack.c.b16 %v611, %v607
    %v648 = vpack.c.b16 %v612, %v608
    %v649 = vpack.c.b16 %v613, %v609
    %v650 = vpack.c.b16 %v614, %v610
    %v651 = vpack.c.b16 %v619, %v615
    %v652 = vpack.c.b16 %v620, %v616
    %v653 = vpack.c.b16 %v621, %v617
    %v654 = vpack.c.b16 %v622, %v618
    %687 = vmatprep.subr.bf16.mxu0 %v652
    %688 = vmatpush1.bf16.msra.mxu0 %v651
    %689 = vmatprep.subr.bf16.mxu0 %v648
    %690 = vmatpush1.bf16.msra.mxu0 %v647
    %691 = vmatprep.subr.bf16.mxu0 %v644
    %692 = vmatpush1.bf16.msra.mxu0 %v643
    %693 = vmatprep.subr.bf16.mxu0 %v640
    %694 = vmatpush1.bf16.msra.mxu0 %v639
    %695 = vmatprep.subr.bf16.mxu0 %v636
    %696 = vmatpush1.bf16.msra.mxu0 %v635
    %697 = vmatprep.subr.bf16.mxu0 %v632
    %698 = vmatpush1.bf16.msra.mxu0 %v631
    %699 = vmatprep.subr.bf16.mxu0 %v628
    %700 = vmatpush1.bf16.msra.mxu0 %v627
    %701 = vmatprep.subr.bf16.mxu0 %v624
    %702 = vmatpush1.bf16.msra.mxu0 %v623
    %703 = vmatprep.subr.bf16.mxu0 0
    %704 = vmatpush2.bf16.msra.mxu0 0
    %705 = vmatprep.subr.bf16.mxu0 0
    %706 = vmatpush2.bf16.msra.mxu0 0
    %707 = vmatprep.subr.bf16.mxu0 0
    %708 = vmatpush2.bf16.msra.mxu0 0
    %709 = vmatprep.subr.bf16.mxu0 0
    %710 = vmatpush2.bf16.msra.mxu0 0
    %711 = vmatprep.subr.bf16.mxu0 0
    %712 = vmatpush2.bf16.msra.mxu0 0
    %713 = vmatprep.subr.bf16.mxu0 0
    %714 = vmatpush2.bf16.msra.mxu0 0
    %715 = vmatprep.subr.bf16.mxu0 0
    %716 = vmatpush2.bf16.msra.mxu0 0
    %717 = vmatprep.subr.bf16.mxu0 0
    %718 = vmatpush2.bf16.msra.mxu0 0
    %719 = vmatprep.mubr.bf16.mxu0 0
    %720 = vmatmul.mubr.bf16.gmra.mxu0 %v494
    %v721 = vpop.f32.mrf.mxu0
    %v722 = vadd.f32 0.0, %v721
    %v723 = vpop.f32.mrf.mxu0
    %v724 = vadd.f32 0.0, %v723
    %v725 = vpop.f32.mrf.mxu0
    %v726 = vpop.f32.mrf.mxu0
    %727 = vdwg.mxu0
    %728 = vmatprep.subr.bf16.mxu0 %v654
    %729 = vmatpush1.bf16.msra.mxu0 %v653
    %730 = vmatprep.subr.bf16.mxu0 %v650
    %731 = vmatpush1.bf16.msra.mxu0 %v649
    %732 = vmatprep.subr.bf16.mxu0 %v646
    %733 = vmatpush1.bf16.msra.mxu0 %v645
    %734 = vmatprep.subr.bf16.mxu0 %v642
    %735 = vmatpush1.bf16.msra.mxu0 %v641
    %736 = vmatprep.subr.bf16.mxu0 %v638
    %737 = vmatpush1.bf16.msra.mxu0 %v637
    %738 = vmatprep.subr.bf16.mxu0 %v634
    %739 = vmatpush1.bf16.msra.mxu0 %v633
    %740 = vmatprep.subr.bf16.mxu0 %v630
    %741 = vmatpush1.bf16.msra.mxu0 %v629
    %742 = vmatprep.subr.bf16.mxu0 %v626
    %743 = vmatpush1.bf16.msra.mxu0 %v625
    %744 = vmatprep.subr.bf16.mxu0 0
    %745 = vmatpush2.bf16.msra.mxu0 0
    %746 = vmatprep.subr.bf16.mxu0 0
    %747 = vmatpush2.bf16.msra.mxu0 0
    %748 = vmatprep.subr.bf16.mxu0 0
    %749 = vmatpush2.bf16.msra.mxu0 0
    %750 = vmatprep.subr.bf16.mxu0 0
    %751 = vmatpush2.bf16.msra.mxu0 0
    %752 = vmatprep.subr.bf16.mxu0 0
    %753 = vmatpush2.bf16.msra.mxu0 0
    %754 = vmatprep.subr.bf16.mxu0 0
    %755 = vmatpush2.bf16.msra.mxu0 0
    %756 = vmatprep.subr.bf16.mxu0 0
    %757 = vmatpush2.bf16.msra.mxu0 0
    %758 = vmatprep.subr.bf16.mxu0 0
    %759 = vmatpush2.bf16.msra.mxu0 0
    %760 = vmatprep.mubr.bf16.mxu0 0
    %761 = vmatmul.mubr.bf16.gmra.mxu0 %v494
    %v762 = vpop.f32.mrf.mxu0
    %v763 = vadd.f32 0.0, %v762
    %v764 = vpop.f32.mrf.mxu0
    %v765 = vadd.f32 0.0, %v764
    %v766 = vpop.f32.mrf.mxu0
    %v767 = vpop.f32.mrf.mxu0
    %768 = vdwg.mxu0
    %v769 = vadd.f32 %v490, %v722
    %v770 = vadd.f32 %v491, %v724
    %v771 = vadd.f32 %v492, %v763
    %v772 = vadd.f32 %v493, %v765
    %v773 = vmul.f32 %v769, 0.5
    %v774 = vtanh.pop %v773
    %v775 = vmul.f32 %v774, 0.5
    %v776 = vadd.f32 %v775, 0.5
    %v777 = vmul.f32 %v770, 0.5
    %v778 = vtanh.pop %v777
    %v779 = vmul.f32 %v778, 0.5
    %v780 = vadd.f32 %v779, 0.5
    %v781 = vtanh.pop %v771
    %v782 = vmul.f32 %v772, 0.5
    %v783 = vtanh.pop %v782
    %v784 = vmul.f32 %v783, 0.5
    %v785 = vadd.f32 %v784, 0.5
    %v786 = vmul.f32 %v780, %v486
    %v787 = vmul.f32 %v776, %v781
    %v788 = vadd.f32 %v786, %v787
    %v789 = vtanh.pop %v788
    %v790 = vmul.f32 %v785, %v789
    %s791 = smul.u32 1, 4
    %s792 = smul.addr %s791, 8
    %s793 = scalar_lea.vmem [#allocation4], %s792
    %v794 = vld [vmem:[%s793] sm:$0xff]
    %v795 = vld [vmem:[%s793 + $0x8] sm:$0xff]
    %v796 = vld [vmem:[%s793 + $0x10] sm:$0xff]
    %v797 = vld [vmem:[%s793 + $0x18] sm:$0xff]
    %v798 = vpack.c.bf16 %v790, %v790
    %799 = vmatprep.subr.bf16.mxu0 %v652
    %800 = vmatpush1.bf16.msra.mxu0 %v651
    %801 = vmatprep.subr.bf16.mxu0 %v648
    %802 = vmatpush1.bf16.msra.mxu0 %v647
    %803 = vmatprep.subr.bf16.mxu0 %v644
    %804 = vmatpush1.bf16.msra.mxu0 %v643
    %805 = vmatprep.subr.bf16.mxu0 %v640
    %806 = vmatpush1.bf16.msra.mxu0 %v639
    %807 = vmatprep.subr.bf16.mxu0 %v636
    %808 = vmatpush1.bf16.msra.mxu0 %v635
    %809 = vmatprep.subr.bf16.mxu0 %v632
    %810 = vmatpush1.bf16.msra.mxu0 %v631
    %811 = vmatprep.subr.bf16.mxu0 %v628
    %812 = vmatpush1.bf16.msra.mxu0 %v627
    %813 = vmatprep.subr.bf16.mxu0 %v624
    %814 = vmatpush1.bf16.msra.mxu0 %v623
    %815 = vmatprep.subr.bf16.mxu0 0
    %816 = vmatpush2.bf16.msra.mxu0 0
    %817 = vmatprep.subr.bf16.mxu0 0
    %818 = vmatpush2.bf16.msra.mxu0 0
    %819 = vmatprep.subr.bf16.mxu0 0
    %820 = vmatpush2.bf16.msra.mxu0 0
    %821 = vmatprep.subr.bf16.mxu0 0
    %822 = vmatpush2.bf16.msra.mxu0 0
    %823 = vmatprep.subr.bf16.mxu0 0
    %824 = vmatpush2.bf16.msra.mxu0 0
    %825 = vmatprep.subr.bf16.mxu0 0
    %826 = vmatpush2.bf16.msra.mxu0 0
    %827 = vmatprep.subr.bf16.mxu0 0
    %828 = vmatpush2.bf16.msra.mxu0 0
    %829 = vmatprep.subr.bf16.mxu0 0
    %830 = vmatpush2.bf16.msra.mxu0 0
    %831 = vmatprep.mubr.bf16.mxu0 0
    %832 = vmatmul.mubr.bf16.gmra.mxu0 %v798
    %v833 = vpop.f32.mrf.mxu0
    %v834 = vadd.f32 0.0, %v833
    %v835 = vpop.f32.mrf.mxu0
    %v836 = vadd.f32 0.0, %v835
    %v837 = vpop.f32.mrf.mxu0
    %v838 = vpop.f32.mrf.mxu0
    %839 = vdwg.mxu0
    %840 = vmatprep.subr.bf16.mxu0 %v654
    %841 = vmatpush1.bf16.msra.mxu0 %v653
    %842 = vmatprep.subr.bf16.mxu0 %v650
    %843 = vmatpush1.bf16.msra.mxu0 %v649
    %844 = vmatprep.subr.bf16.mxu0 %v646
    %845 = vmatpush1.bf16.msra.mxu0 %v645
    %846 = vmatprep.subr.bf16.mxu0 %v642
    %847 = vmatpush1.bf16.msra.mxu0 %v641
    %848 = vmatprep.subr.bf16.mxu0 %v638
    %849 = vmatpush1.bf16.msra.mxu0 %v637
    %850 = vmatprep.subr.bf16.mxu0 %v634
    %851 = vmatpush1.bf16.msra.mxu0 %v633
    %852 = vmatprep.subr.bf16.mxu0 %v630
    %853 = vmatpush1.bf16.msra.mxu0 %v629
    %854 = vmatprep.subr.bf16.mxu0 %v626
    %855 = vmatpush1.bf16.msra.mxu0 %v625
    %856 = vmatprep.subr.bf16.mxu0 0
    %857 = vmatpush2.bf16.msra.mxu0 0
    %858 = vmatprep.subr.bf16.mxu0 0
    %859 = vmatpush2.bf16.msra.mxu0 0
    %860 = vmatprep.subr.bf16.mxu0 0
    %861 = vmatpush2.bf16.msra.mxu0 0
    %862 = vmatprep.subr.bf16.mxu0 0
    %863 = vmatpush2.bf16.msra.mxu0 0
    %864 = vmatprep.subr.bf16.mxu0 0
    %865 = vmatpush2.bf16.msra.mxu0 0
    %866 = vmatprep.subr.bf16.mxu0 0
    %867 = vmatpush2.bf16.msra.mxu0 0
    %868 = vmatprep.subr.bf16.mxu0 0
    %869 = vmatpush2.bf16.msra.mxu0 0
    %870 = vmatprep.subr.bf16.mxu0 0
    %871 = vmatpush2.bf16.msra.mxu0 0
    %872 = vmatprep.mubr.bf16.mxu0 0
    %873 = vmatmul.mubr.bf16.gmra.mxu0 %v798
    %v874 = vpop.f32.mrf.mxu0
    %v875 = vadd.f32 0.0, %v874
    %v876 = vpop.f32.mrf.mxu0
    %v877 = vadd.f32 0.0, %v876
    %v878 = vpop.f32.mrf.mxu0
    %v879 = vpop.f32.mrf.mxu0
    %880 = vdwg.mxu0
    %v881 = vadd.f32 %v794, %v834
    %v882 = vadd.f32 %v795, %v836
    %v883 = vadd.f32 %v796, %v875
    %v884 = vadd.f32 %v797, %v877
    %v885 = vmul.f32 %v881, 0.5
    %v886 = vtanh.pop %v885
    %v887 = vmul.f32 %v886, 0.5
    %v888 = vadd.f32 %v887, 0.5
    %v889 = vmul.f32 %v882, 0.5
    %v890 = vtanh.pop %v889
    %v891 = vmul.f32 %v890, 0.5
    %v892 = vadd.f32 %v891, 0.5
    %v893 = vtanh.pop %v883
    %v894 = vmul.f32 %v884, 0.5
    %v895 = vtanh.pop %v894
    %v896 = vmul.f32 %v895, 0.5
    %v897 = vadd.f32 %v896, 0.5
    %v898 = vmul.f32 %v892, %v788
    %v899 = vmul.f32 %v888, %v893
    %v900 = vadd.f32 %v898, %v899
    %v901 = vtanh.pop %v900
    %v902 = vmul.f32 %v897, %v901
    %s903 = smul.u32 2, 4
    %s904 = smul.addr %s903, 8
    %s905 = scalar_lea.vmem [#allocation4], %s904
    %v906 = vld [vmem:[%s905] sm:$0xff]
    %v907 = vld [vmem:[%s905 + $0x8] sm:$0xff]
    %v908 = vld [vmem:[%s905 + $0x10] sm:$0xff]
    %v909 = vld [vmem:[%s905 + $0x18] sm:$0xff]
    %v910 = vpack.c.bf16 %v902, %v902
    %911 = vmatprep.subr.bf16.mxu0 %v652
    %912 = vmatpush1.bf16.msra.mxu0 %v651
    %913 = vmatprep.subr.bf16.mxu0 %v648
    %914 = vmatpush1.bf16.msra.mxu0 %v647
    %915 = vmatprep.subr.bf16.mxu0 %v644
    %916 = vmatpush1.bf16.msra.mxu0 %v643
    %917 = vmatprep.subr.bf16.mxu0 %v640
    %918 = vmatpush1.bf16.msra.mxu0 %v639
    %919 = vmatprep.subr.bf16.mxu0 %v636
    %920 = vmatpush1.bf16.msra.mxu0 %v635
    %921 = vmatprep.subr.bf16.mxu0 %v632
    %922 = vmatpush1.bf16.msra.mxu0 %v631
    %923 = vmatprep.subr.bf16.mxu0 %v628
    %924 = vmatpush1.bf16.msra.mxu0 %v627
    %925 = vmatprep.subr.bf16.mxu0 %v624
    %926 = vmatpush1.bf16.msra.mxu0 %v623
    %927 = vmatprep.subr.bf16.mxu0 0
    %928 = vmatpush2.bf16.msra.mxu0 0
    %929 = vmatprep.subr.bf16.mxu0 0
    %930 = vmatpush2.bf16.msra.mxu0 0
    %931 = vmatprep.subr.bf16.mxu0 0
    %932 = vmatpush2.bf16.msra.mxu0 0
    %933 = vmatprep.subr.bf16.mxu0 0
    %934 = vmatpush2.bf16.msra.mxu0 0
    %935 = vmatprep.subr.bf16.mxu0 0
    %936 = vmatpush2.bf16.msra.mxu0 0
    %937 = vmatprep.subr.bf16.mxu0 0
    %938 = vmatpush2.bf16.msra.mxu0 0
    %939 = vmatprep.subr.bf16.mxu0 0
    %940 = vmatpush2.bf16.msra.mxu0 0
    %941 = vmatprep.subr.bf16.mxu0 0
    %942 = vmatpush2.bf16.msra.mxu0 0
    %943 = vmatprep.mubr.bf16.mxu0 0
    %944 = vmatmul.mubr.bf16.gmra.mxu0 %v910
    %v945 = vpop.f32.mrf.mxu0
    %v946 = vadd.f32 0.0, %v945
    %v947 = vpop.f32.mrf.mxu0
    %v948 = vadd.f32 0.0, %v947
    %v949 = vpop.f32.mrf.mxu0
    %v950 = vpop.f32.mrf.mxu0
    %951 = vdwg.mxu0
    %952 = vmatprep.subr.bf16.mxu0 %v654
    %953 = vmatpush1.bf16.msra.mxu0 %v653
    %954 = vmatprep.subr.bf16.mxu0 %v650
    %955 = vmatpush1.bf16.msra.mxu0 %v649
    %956 = vmatprep.subr.bf16.mxu0 %v646
    %957 = vmatpush1.bf16.msra.mxu0 %v645
    %958 = vmatprep.subr.bf16.mxu0 %v642
    %959 = vmatpush1.bf16.msra.mxu0 %v641
    %960 = vmatprep.subr.bf16.mxu0 %v638
    %961 = vmatpush1.bf16.msra.mxu0 %v637
    %962 = vmatprep.subr.bf16.mxu0 %v634
    %963 = vmatpush1.bf16.msra.mxu0 %v633
    %964 = vmatprep.subr.bf16.mxu0 %v630
    %965 = vmatpush1.bf16.msra.mxu0 %v629
    %966 = vmatprep.subr.bf16.mxu0 %v626
    %967 = vmatpush1.bf16.msra.mxu0 %v625
    %968 = vmatprep.subr.bf16.mxu0 0
    %969 = vmatpush2.bf16.msra.mxu0 0
    %970 = vmatprep.subr.bf16.mxu0 0
    %971 = vmatpush2.bf16.msra.mxu0 0
    %972 = vmatprep.subr.bf16.mxu0 0
    %973 = vmatpush2.bf16.msra.mxu0 0
    %974 = vmatprep.subr.bf16.mxu0 0
    %975 = vmatpush2.bf16.msra.mxu0 0
    %976 = vmatprep.subr.bf16.mxu0 0
    %977 = vmatpush2.bf16.msra.mxu0 0
    %978 = vmatprep.subr.bf16.mxu0 0
    %979 = vmatpush2.bf16.msra.mxu0 0
    %980 = vmatprep.subr.bf16.mxu0 0
    %981 = vmatpush2.bf16.msra.mxu0 0
    %982 = vmatprep.subr.bf16.mxu0 0
    %983 = vmatpush2.bf16.msra.mxu0 0
    %984 = vmatprep.mubr.bf16.mxu0 0
    %985 = vmatmul.mubr.bf16.gmra.mxu0 %v910
    %v986 = vpop.f32.mrf.mxu0
    %v987 = vadd.f32 0.0, %v986
    %v988 = vpop.f32.mrf.mxu0
    %v989 = vadd.f32 0.0, %v988
    %v990 = vpop.f32.mrf.mxu0
    %v991 = vpop.f32.mrf.mxu0
    %992 = vdwg.mxu0
    %v993 = vadd.f32 %v906, %v946
    %v994 = vadd.f32 %v907, %v948
    %v995 = vadd.f32 %v908, %v987
    %v996 = vadd.f32 %v909, %v989
    %v997 = vmul.f32 %v993, 0.5
    %v998 = vtanh.pop %v997
    %v999 = vmul.f32 %v998, 0.5
    %v1000 = vadd.f32 %v999, 0.5
    %v1001 = vmul.f32 %v994, 0.5
    %v1002 = vtanh.pop %v1001
    %v1003 = vmul.f32 %v1002, 0.5
    %v1004 = vadd.f32 %v1003, 0.5
    %v1005 = vtanh.pop %v995
    %v1006 = vmul.f32 %v996, 0.5
    %v1007 = vtanh.pop %v1006
    %v1008 = vmul.f32 %v1007, 0.5
    %v1009 = vadd.f32 %v1008, 0.5
    %v1010 = vmul.f32 %v1004, %v900
    %v1011 = vmul.f32 %v1000, %v1005
    %v1012 = vadd.f32 %v1010, %v1011
    %v1013 = vtanh.pop %v1012
    %v1014 = vmul.f32 %v1009, %v1013
    %s1015 = smul.u32 3, 4
    %s1016 = smul.addr %s1015, 8
    %s1017 = scalar_lea.vmem [#allocation4], %s1016
    %v1018 = vld [vmem:[%s1017] sm:$0xff]
    %v1019 = vld [vmem:[%s1017 + $0x8] sm:$0xff]
    %v1020 = vld [vmem:[%s1017 + $0x10] sm:$0xff]
    %v1021 = vld [vmem:[%s1017 + $0x18] sm:$0xff]
    %v1022 = vpack.c.bf16 %v1014, %v1014
    %1023 = vmatprep.subr.bf16.mxu0 %v652
    %1024 = vmatpush1.bf16.msra.mxu0 %v651
    %1025 = vmatprep.subr.bf16.mxu0 %v648
    %1026 = vmatpush1.bf16.msra.mxu0 %v647
    %1027 = vmatprep.subr.bf16.mxu0 %v644
    %1028 = vmatpush1.bf16.msra.mxu0 %v643
    %1029 = vmatprep.subr.bf16.mxu0 %v640
    %1030 = vmatpush1.bf16.msra.mxu0 %v639
    %1031 = vmatprep.subr.bf16.mxu0 %v636
    %1032 = vmatpush1.bf16.msra.mxu0 %v635
    %1033 = vmatprep.subr.bf16.mxu0 %v632
    %1034 = vmatpush1.bf16.msra.mxu0 %v631
    %1035 = vmatprep.subr.bf16.mxu0 %v628
    %1036 = vmatpush1.bf16.msra.mxu0 %v627
    %1037 = vmatprep.subr.bf16.mxu0 %v624
    %1038 = vmatpush1.bf16.msra.mxu0 %v623
    %1039 = vmatprep.subr.bf16.mxu0 0
    %1040 = vmatpush2.bf16.msra.mxu0 0
    %1041 = vmatprep.subr.bf16.mxu0 0
    %1042 = vmatpush2.bf16.msra.mxu0 0
    %1043 = vmatprep.subr.bf16.mxu0 0
    %1044 = vmatpush2.bf16.msra.mxu0 0
    %1045 = vmatprep.subr.bf16.mxu0 0
    %1046 = vmatpush2.bf16.msra.mxu0 0
    %1047 = vmatprep.subr.bf16.mxu0 0
    %1048 = vmatpush2.bf16.msra.mxu0 0
    %1049 = vmatprep.subr.bf16.mxu0 0
    %1050 = vmatpush2.bf16.msra.mxu0 0
    %1051 = vmatprep.subr.bf16.mxu0 0
    %1052 = vmatpush2.bf16.msra.mxu0 0
    %1053 = vmatprep.subr.bf16.mxu0 0
    %1054 = vmatpush2.bf16.msra.mxu0 0
    %1055 = vmatprep.mubr.bf16.mxu0 0
    %1056 = vmatmul.mubr.bf16.gmra.mxu0 %v1022
    %v1057 = vpop.f32.mrf.mxu0
    %v1058 = vadd.f32 0.0, %v1057
    %v1059 = vpop.f32.mrf.mxu0
    %v1060 = vadd.f32 0.0, %v1059
    %v1061 = vpop.f32.mrf.mxu0
    %v1062 = vpop.f32.mrf.mxu0
    %1063 = vdwg.mxu0
    %1064 = vmatprep.subr.bf16.mxu0 %v654
    %1065 = vmatpush1.bf16.msra.mxu0 %v653
    %1066 = vmatprep.subr.bf16.mxu0 %v650
    %1067 = vmatpush1.bf16.msra.mxu0 %v649
    %1068 = vmatprep.subr.bf16.mxu0 %v646
    %1069 = vmatpush1.bf16.msra.mxu0 %v645
    %1070 = vmatprep.subr.bf16.mxu0 %v642
    %1071 = vmatpush1.bf16.msra.mxu0 %v641
    %1072 = vmatprep.subr.bf16.mxu0 %v638
    %1073 = vmatpush1.bf16.msra.mxu0 %v637
    %1074 = vmatprep.subr.bf16.mxu0 %v634
    %1075 = vmatpush1.bf16.msra.mxu0 %v633
    %1076 = vmatprep.subr.bf16.mxu0 %v630
    %1077 = vmatpush1.bf16.msra.mxu0 %v629
    %1078 = vmatprep.subr.bf16.mxu0 %v626
    %1079 = vmatpush1.bf16.msra.mxu0 %v625
    %1080 = vmatprep.subr.bf16.mxu0 0
    %1081 = vmatpush2.bf16.msra.mxu0 0
    %1082 = vmatprep.subr.bf16.mxu0 0
    %1083 = vmatpush2.bf16.msra.mxu0 0
    %1084 = vmatprep.subr.bf16.mxu0 0
    %1085 = vmatpush2.bf16.msra.mxu0 0
    %1086 = vmatprep.subr.bf16.mxu0 0
    %1087 = vmatpush2.bf16.msra.mxu0 0
    %1088 = vmatprep.subr.bf16.mxu0 0
    %1089 = vmatpush2.bf16.msra.mxu0 0
    %1090 = vmatprep.subr.bf16.mxu0 0
    %1091 = vmatpush2.bf16.msra.mxu0 0
    %1092 = vmatprep.subr.bf16.mxu0 0
    %1093 = vmatpush2.bf16.msra.mxu0 0
    %1094 = vmatprep.subr.bf16.mxu0 0
    %1095 = vmatpush2.bf16.msra.mxu0 0
    %1096 = vmatprep.mubr.bf16.mxu0 0
    %1097 = vmatmul.mubr.bf16.gmra.mxu0 %v1022
    %v1098 = vpop.f32.mrf.mxu0
    %v1099 = vadd.f32 0.0, %v1098
    %v1100 = vpop.f32.mrf.mxu0
    %v1101 = vadd.f32 0.0, %v1100
    %v1102 = vpop.f32.mrf.mxu0
    %v1103 = vpop.f32.mrf.mxu0
    %1104 = vdwg.mxu0
    %v1105 = vadd.f32 %v1018, %v1058
    %v1106 = vadd.f32 %v1019, %v1060
    %v1107 = vadd.f32 %v1020, %v1099
    %v1108 = vadd.f32 %v1021, %v1101
    %v1109 = vmul.f32 %v1105, 0.5
    %v1110 = vtanh.pop %v1109
    %v1111 = vmul.f32 %v1110, 0.5
    %v1112 = vadd.f32 %v1111, 0.5
    %v1113 = vmul.f32 %v1106, 0.5
    %v1114 = vtanh.pop %v1113
    %v1115 = vmul.f32 %v1114, 0.5
    %v1116 = vadd.f32 %v1115, 0.5
    %v1117 = vtanh.pop %v1107
    %v1118 = vmul.f32 %v1108, 0.5
    %v1119 = vtanh.pop %v1118
    %v1120 = vmul.f32 %v1119, 0.5
    %v1121 = vadd.f32 %v1120, 0.5
    %v1122 = vmul.f32 %v1116, %v1012
    %v1123 = vmul.f32 %v1112, %v1117
    %v1124 = vadd.f32 %v1122, %v1123
    %v1125 = vtanh.pop %v1124
    %v1126 = vmul.f32 %v1121, %v1125
    %s1127 = smul.u32 4, 4
    %s1128 = smul.addr %s1127, 8
    %s1129 = scalar_lea.vmem [#allocation4], %s1128
    %v1130 = vld [vmem:[%s1129] sm:$0xff]
    %v1131 = vld [vmem:[%s1129 + $0x8] sm:$0xff]
    %v1132 = vld [vmem:[%s1129 + $0x10] sm:$0xff]
    %v1133 = vld [vmem:[%s1129 + $0x18] sm:$0xff]
    %v1134 = vpack.c.bf16 %v1126, %v1126
    %1135 = vmatprep.subr.bf16.mxu0 %v652
    %1136 = vmatpush1.bf16.msra.mxu0 %v651
    %1137 = vmatprep.subr.bf16.mxu0 %v648
    %1138 = vmatpush1.bf16.msra.mxu0 %v647
    %1139 = vmatprep.subr.bf16.mxu0 %v644
    %1140 = vmatpush1.bf16.msra.mxu0 %v643
    %1141 = vmatprep.subr.bf16.mxu0 %v640
    %1142 = vmatpush1.bf16.msra.mxu0 %v639
    %1143 = vmatprep.subr.bf16.mxu0 %v636
    %1144 = vmatpush1.bf16.msra.mxu0 %v635
    %1145 = vmatprep.subr.bf16.mxu0 %v632
    %1146 = vmatpush1.bf16.msra.mxu0 %v631
    %1147 = vmatprep.subr.bf16.mxu0 %v628
    %1148 = vmatpush1.bf16.msra.mxu0 %v627
    %1149 = vmatprep.subr.bf16.mxu0 %v624
    %1150 = vmatpush1.bf16.msra.mxu0 %v623
    %1151 = vmatprep.subr.bf16.mxu0 0
    %1152 = vmatpush2.bf16.msra.mxu0 0
    %1153 = vmatprep.subr.bf16.mxu0 0
    %1154 = vmatpush2.bf16.msra.mxu0 0
    %1155 = vmatprep.subr.bf16.mxu0 0
    %1156 = vmatpush2.bf16.msra.mxu0 0
    %1157 = vmatprep.subr.bf16.mxu0 0
    %1158 = vmatpush2.bf16.msra.mxu0 0
    %1159 = vmatprep.subr.bf16.mxu0 0
    %1160 = vmatpush2.bf16.msra.mxu0 0
    %1161 = vmatprep.subr.bf16.mxu0 0
    %1162 = vmatpush2.bf16.msra.mxu0 0
    %1163 = vmatprep.subr.bf16.mxu0 0
    %1164 = vmatpush2.bf16.msra.mxu0 0
    %1165 = vmatprep.subr.bf16.mxu0 0
    %1166 = vmatpush2.bf16.msra.mxu0 0
    %1167 = vmatprep.mubr.bf16.mxu0 0
    %1168 = vmatmul.mubr.bf16.gmra.mxu0 %v1134
    %v1169 = vpop.f32.mrf.mxu0
    %v1170 = vadd.f32 0.0, %v1169
    %v1171 = vpop.f32.mrf.mxu0
    %v1172 = vadd.f32 0.0, %v1171
    %v1173 = vpop.f32.mrf.mxu0
    %v1174 = vpop.f32.mrf.mxu0
    %1175 = vdwg.mxu0
    %1176 = vmatprep.subr.bf16.mxu0 %v654
    %1177 = vmatpush1.bf16.msra.mxu0 %v653
    %1178 = vmatprep.subr.bf16.mxu0 %v650
    %1179 = vmatpush1.bf16.msra.mxu0 %v649
    %1180 = vmatprep.subr.bf16.mxu0 %v646
    %1181 = vmatpush1.bf16.msra.mxu0 %v645
    %1182 = vmatprep.subr.bf16.mxu0 %v642
    %1183 = vmatpush1.bf16.msra.mxu0 %v641
    %1184 = vmatprep.subr.bf16.mxu0 %v638
    %1185 = vmatpush1.bf16.msra.mxu0 %v637
    %1186 = vmatprep.subr.bf16.mxu0 %v634
    %1187 = vmatpush1.bf16.msra.mxu0 %v633
    %1188 = vmatprep.subr.bf16.mxu0 %v630
    %1189 = vmatpush1.bf16.msra.mxu0 %v629
    %1190 = vmatprep.subr.bf16.mxu0 %v626
    %1191 = vmatpush1.bf16.msra.mxu0 %v625
    %1192 = vmatprep.subr.bf16.mxu0 0
    %1193 = vmatpush2.bf16.msra.mxu0 0
    %1194 = vmatprep.subr.bf16.mxu0 0
    %1195 = vmatpush2.bf16.msra.mxu0 0
    %1196 = vmatprep.subr.bf16.mxu0 0
    %1197 = vmatpush2.bf16.msra.mxu0 0
    %1198 = vmatprep.subr.bf16.mxu0 0
    %1199 = vmatpush2.bf16.msra.mxu0 0
    %1200 = vmatprep.subr.bf16.mxu0 0
    %1201 = vmatpush2.bf16.msra.mxu0 0
    %1202 = vmatprep.subr.bf16.mxu0 0
    %1203 = vmatpush2.bf16.msra.mxu0 0
    %1204 = vmatprep.subr.bf16.mxu0 0
    %1205 = vmatpush2.bf16.msra.mxu0 0
    %1206 = vmatprep.subr.bf16.mxu0 0
    %1207 = vmatpush2.bf16.msra.mxu0 0
    %1208 = vmatprep.mubr.bf16.mxu0 0
    %1209 = vmatmul.mubr.bf16.gmra.mxu0 %v1134
    %v1210 = vpop.f32.mrf.mxu0
    %v1211 = vadd.f32 0.0, %v1210
    %v1212 = vpop.f32.mrf.mxu0
    %v1213 = vadd.f32 0.0, %v1212
    %v1214 = vpop.f32.mrf.mxu0
    %v1215 = vpop.f32.mrf.mxu0
    %1216 = vdwg.mxu0
    %v1217 = vadd.f32 %v1130, %v1170
    %v1218 = vadd.f32 %v1131, %v1172
    %v1219 = vadd.f32 %v1132, %v1211
    %v1220 = vadd.f32 %v1133, %v1213
    %v1221 = vmul.f32 %v1217, 0.5
    %v1222 = vtanh.pop %v1221
    %v1223 = vmul.f32 %v1222, 0.5
    %v1224 = vadd.f32 %v1223, 0.5
    %v1225 = vmul.f32 %v1218, 0.5
    %v1226 = vtanh.pop %v1225
    %v1227 = vmul.f32 %v1226, 0.5
    %v1228 = vadd.f32 %v1227, 0.5
    %v1229 = vtanh.pop %v1219
    %v1230 = vmul.f32 %v1220, 0.5
    %v1231 = vtanh.pop %v1230
    %v1232 = vmul.f32 %v1231, 0.5
    %v1233 = vadd.f32 %v1232, 0.5
    %v1234 = vmul.f32 %v1228, %v1124
    %v1235 = vmul.f32 %v1224, %v1229
    %v1236 = vadd.f32 %v1234, %v1235
    %v1237 = vtanh.pop %v1236
    %v1238 = vmul.f32 %v1233, %v1237
    %s1239 = smul.u32 5, 4
    %s1240 = smul.addr %s1239, 8
    %s1241 = scalar_lea.vmem [#allocation4], %s1240
    %v1242 = vld [vmem:[%s1241] sm:$0xff]
    %v1243 = vld [vmem:[%s1241 + $0x8] sm:$0xff]
    %v1244 = vld [vmem:[%s1241 + $0x10] sm:$0xff]
    %v1245 = vld [vmem:[%s1241 + $0x18] sm:$0xff]
    %v1246 = vpack.c.bf16 %v1238, %v1238
    %1247 = vmatprep.subr.bf16.mxu0 %v652
    %1248 = vmatpush1.bf16.msra.mxu0 %v651
    %1249 = vmatprep.subr.bf16.mxu0 %v648
    %1250 = vmatpush1.bf16.msra.mxu0 %v647
    %1251 = vmatprep.subr.bf16.mxu0 %v644
    %1252 = vmatpush1.bf16.msra.mxu0 %v643
    %1253 = vmatprep.subr.bf16.mxu0 %v640
    %1254 = vmatpush1.bf16.msra.mxu0 %v639
    %1255 = vmatprep.subr.bf16.mxu0 %v636
    %1256 = vmatpush1.bf16.msra.mxu0 %v635
    %1257 = vmatprep.subr.bf16.mxu0 %v632
    %1258 = vmatpush1.bf16.msra.mxu0 %v631
    %1259 = vmatprep.subr.bf16.mxu0 %v628
    %1260 = vmatpush1.bf16.msra.mxu0 %v627
    %1261 = vmatprep.subr.bf16.mxu0 %v624
    %1262 = vmatpush1.bf16.msra.mxu0 %v623
    %1263 = vmatprep.subr.bf16.mxu0 0
    %1264 = vmatpush2.bf16.msra.mxu0 0
    %1265 = vmatprep.subr.bf16.mxu0 0
    %1266 = vmatpush2.bf16.msra.mxu0 0
    %1267 = vmatprep.subr.bf16.mxu0 0
    %1268 = vmatpush2.bf16.msra.mxu0 0
    %1269 = vmatprep.subr.bf16.mxu0 0
    %1270 = vmatpush2.bf16.msra.mxu0 0
    %1271 = vmatprep.subr.bf16.mxu0 0
    %1272 = vmatpush2.bf16.msra.mxu0 0
    %1273 = vmatprep.subr.bf16.mxu0 0
    %1274 = vmatpush2.bf16.msra.mxu0 0
    %1275 = vmatprep.subr.bf16.mxu0 0
    %1276 = vmatpush2.bf16.msra.mxu0 0
    %1277 = vmatprep.subr.bf16.mxu0 0
    %1278 = vmatpush2.bf16.msra.mxu0 0
    %1279 = vmatprep.mubr.bf16.mxu0 0
    %1280 = vmatmul.mubr.bf16.gmra.mxu0 %v1246
    %v1281 = vpop.f32.mrf.mxu0
    %v1282 = vadd.f32 0.0, %v1281
    %v1283 = vpop.f32.mrf.mxu0
    %v1284 = vadd.f32 0.0, %v1283
    %v1285 = vpop.f32.mrf.mxu0
    %v1286 = vpop.f32.mrf.mxu0
    %1287 = vdwg.mxu0
    %1288 = vmatprep.subr.bf16.mxu0 %v654
    %1289 = vmatpush1.bf16.msra.mxu0 %v653
    %1290 = vmatprep.subr.bf16.mxu0 %v650
    %1291 = vmatpush1.bf16.msra.mxu0 %v649
    %1292 = vmatprep.subr.bf16.mxu0 %v646
    %1293 = vmatpush1.bf16.msra.mxu0 %v645
    %1294 = vmatprep.subr.bf16.mxu0 %v642
    %1295 = vmatpush1.bf16.msra.mxu0 %v641
    %1296 = vmatprep.subr.bf16.mxu0 %v638
    %1297 = vmatpush1.bf16.msra.mxu0 %v637
    %1298 = vmatprep.subr.bf16.mxu0 %v634
    %1299 = vmatpush1.bf16.msra.mxu0 %v633
    %1300 = vmatprep.subr.bf16.mxu0 %v630
    %1301 = vmatpush1.bf16.msra.mxu0 %v629
    %1302 = vmatprep.subr.bf16.mxu0 %v626
    %1303 = vmatpush1.bf16.msra.mxu0 %v625
    %1304 = vmatprep.subr.bf16.mxu0 0
    %1305 = vmatpush2.bf16.msra.mxu0 0
    %1306 = vmatprep.subr.bf16.mxu0 0
    %1307 = vmatpush2.bf16.msra.mxu0 0
    %1308 = vmatprep.subr.bf16.mxu0 0
    %1309 = vmatpush2.bf16.msra.mxu0 0
    %1310 = vmatprep.subr.bf16.mxu0 0
    %1311 = vmatpush2.bf16.msra.mxu0 0
    %1312 = vmatprep.subr.bf16.mxu0 0
    %1313 = vmatpush2.bf16.msra.mxu0 0
    %1314 = vmatprep.subr.bf16.mxu0 0
    %1315 = vmatpush2.bf16.msra.mxu0 0
    %1316 = vmatprep.subr.bf16.mxu0 0
    %1317 = vmatpush2.bf16.msra.mxu0 0
    %1318 = vmatprep.subr.bf16.mxu0 0
    %1319 = vmatpush2.bf16.msra.mxu0 0
    %1320 = vmatprep.mubr.bf16.mxu0 0
    %1321 = vmatmul.mubr.bf16.gmra.mxu0 %v1246
    %v1322 = vpop.f32.mrf.mxu0
    %v1323 = vadd.f32 0.0, %v1322
    %v1324 = vpop.f32.mrf.mxu0
    %v1325 = vadd.f32 0.0, %v1324
    %v1326 = vpop.f32.mrf.mxu0
    %v1327 = vpop.f32.mrf.mxu0
    %1328 = vdwg.mxu0
    %v1329 = vadd.f32 %v1242, %v1282
    %v1330 = vadd.f32 %v1243, %v1284
    %v1331 = vadd.f32 %v1244, %v1323
    %v1332 = vadd.f32 %v1245, %v1325
    %v1333 = vmul.f32 %v1329, 0.5
    %v1334 = vtanh.pop %v1333
    %v1335 = vmul.f32 %v1334, 0.5
    %v1336 = vadd.f32 %v1335, 0.5
    %v1337 = vmul.f32 %v1330, 0.5
    %v1338 = vtanh.pop %v1337
    %v1339 = vmul.f32 %v1338, 0.5
    %v1340 = vadd.f32 %v1339, 0.5
    %v1341 = vtanh.pop %v1331
    %v1342 = vmul.f32 %v1332, 0.5
    %v1343 = vtanh.pop %v1342
    %v1344 = vmul.f32 %v1343, 0.5
    %v1345 = vadd.f32 %v1344, 0.5
    %v1346 = vmul.f32 %v1340, %v1236
    %v1347 = vmul.f32 %v1336, %v1341
    %v1348 = vadd.f32 %v1346, %v1347
    %v1349 = vtanh.pop %v1348
    %v1350 = vmul.f32 %v1345, %v1349
    %s1351 = smul.u32 6, 4
    %s1352 = smul.addr %s1351, 8
    %s1353 = scalar_lea.vmem [#allocation4], %s1352
    %v1354 = vld [vmem:[%s1353] sm:$0xff]
    %v1355 = vld [vmem:[%s1353 + $0x8] sm:$0xff]
    %v1356 = vld [vmem:[%s1353 + $0x10] sm:$0xff]
    %v1357 = vld [vmem:[%s1353 + $0x18] sm:$0xff]
    %v1358 = vpack.c.bf16 %v1350, %v1350
    %1359 = vmatprep.subr.bf16.mxu0 %v652
    %1360 = vmatpush1.bf16.msra.mxu0 %v651
    %1361 = vmatprep.subr.bf16.mxu0 %v648
    %1362 = vmatpush1.bf16.msra.mxu0 %v647
    %1363 = vmatprep.subr.bf16.mxu0 %v644
    %1364 = vmatpush1.bf16.msra.mxu0 %v643
    %1365 = vmatprep.subr.bf16.mxu0 %v640
    %1366 = vmatpush1.bf16.msra.mxu0 %v639
    %1367 = vmatprep.subr.bf16.mxu0 %v636
    %1368 = vmatpush1.bf16.msra.mxu0 %v635
    %1369 = vmatprep.subr.bf16.mxu0 %v632
    %1370 = vmatpush1.bf16.msra.mxu0 %v631
    %1371 = vmatprep.subr.bf16.mxu0 %v628
    %1372 = vmatpush1.bf16.msra.mxu0 %v627
    %1373 = vmatprep.subr.bf16.mxu0 %v624
    %1374 = vmatpush1.bf16.msra.mxu0 %v623
    %1375 = vmatprep.subr.bf16.mxu0 0
    %1376 = vmatpush2.bf16.msra.mxu0 0
    %1377 = vmatprep.subr.bf16.mxu0 0
    %1378 = vmatpush2.bf16.msra.mxu0 0
    %1379 = vmatprep.subr.bf16.mxu0 0
    %1380 = vmatpush2.bf16.msra.mxu0 0
    %1381 = vmatprep.subr.bf16.mxu0 0
    %1382 = vmatpush2.bf16.msra.mxu0 0
    %1383 = vmatprep.subr.bf16.mxu0 0
    %1384 = vmatpush2.bf16.msra.mxu0 0
    %1385 = vmatprep.subr.bf16.mxu0 0
    %1386 = vmatpush2.bf16.msra.mxu0 0
    %1387 = vmatprep.subr.bf16.mxu0 0
    %1388 = vmatpush2.bf16.msra.mxu0 0
    %1389 = vmatprep.subr.bf16.mxu0 0
    %1390 = vmatpush2.bf16.msra.mxu0 0
    %1391 = vmatprep.mubr.bf16.mxu0 0
    %1392 = vmatmul.mubr.bf16.gmra.mxu0 %v1358
    %v1393 = vpop.f32.mrf.mxu0
    %v1394 = vadd.f32 0.0, %v1393
    %v1395 = vpop.f32.mrf.mxu0
    %v1396 = vadd.f32 0.0, %v1395
    %v1397 = vpop.f32.mrf.mxu0
    %v1398 = vpop.f32.mrf.mxu0
    %1399 = vdwg.mxu0
    %1400 = vmatprep.subr.bf16.mxu0 %v654
    %1401 = vmatpush1.bf16.msra.mxu0 %v653
    %1402 = vmatprep.subr.bf16.mxu0 %v650
    %1403 = vmatpush1.bf16.msra.mxu0 %v649
    %1404 = vmatprep.subr.bf16.mxu0 %v646
    %1405 = vmatpush1.bf16.msra.mxu0 %v645
    %1406 = vmatprep.subr.bf16.mxu0 %v642
    %1407 = vmatpush1.bf16.msra.mxu0 %v641
    %1408 = vmatprep.subr.bf16.mxu0 %v638
    %1409 = vmatpush1.bf16.msra.mxu0 %v637
    %1410 = vmatprep.subr.bf16.mxu0 %v634
    %1411 = vmatpush1.bf16.msra.mxu0 %v633
    %1412 = vmatprep.subr.bf16.mxu0 %v630
    %1413 = vmatpush1.bf16.msra.mxu0 %v629
    %1414 = vmatprep.subr.bf16.mxu0 %v626
    %1415 = vmatpush1.bf16.msra.mxu0 %v625
    %1416 = vmatprep.subr.bf16.mxu0 0
    %1417 = vmatpush2.bf16.msra.mxu0 0
    %1418 = vmatprep.subr.bf16.mxu0 0
    %1419 = vmatpush2.bf16.msra.mxu0 0
    %1420 = vmatprep.subr.bf16.mxu0 0
    %1421 = vmatpush2.bf16.msra.mxu0 0
    %1422 = vmatprep.subr.bf16.mxu0 0
    %1423 = vmatpush2.bf16.msra.mxu0 0
    %1424 = vmatprep.subr.bf16.mxu0 0
    %1425 = vmatpush2.bf16.msra.mxu0 0
    %1426 = vmatprep.subr.bf16.mxu0 0
    %1427 = vmatpush2.bf16.msra.mxu0 0
    %1428 = vmatprep.subr.bf16.mxu0 0
    %1429 = vmatpush2.bf16.msra.mxu0 0
    %1430 = vmatprep.subr.bf16.mxu0 0
    %1431 = vmatpush2.bf16.msra.mxu0 0
    %1432 = vmatprep.mubr.bf16.mxu0 0
    %1433 = vmatmul.mubr.bf16.gmra.mxu0 %v1358
    %v1434 = vpop.f32.mrf.mxu0
    %v1435 = vadd.f32 0.0, %v1434
    %v1436 = vpop.f32.mrf.mxu0
    %v1437 = vadd.f32 0.0, %v1436
    %v1438 = vpop.f32.mrf.mxu0
    %v1439 = vpop.f32.mrf.mxu0
    %1440 = vdwg.mxu0
    %v1441 = vadd.f32 %v1354, %v1394
    %v1442 = vadd.f32 %v1355, %v1396
    %v1443 = vadd.f32 %v1356, %v1435
    %v1444 = vadd.f32 %v1357, %v1437
    %v1445 = vmul.f32 %v1441, 0.5
    %v1446 = vtanh.pop %v1445
    %v1447 = vmul.f32 %v1446, 0.5
    %v1448 = vadd.f32 %v1447, 0.5
    %v1449 = vmul.f32 %v1442, 0.5
    %v1450 = vtanh.pop %v1449
    %v1451 = vmul.f32 %v1450, 0.5
    %v1452 = vadd.f32 %v1451, 0.5
    %v1453 = vtanh.pop %v1443
    %v1454 = vmul.f32 %v1444, 0.5
    %v1455 = vtanh.pop %v1454
    %v1456 = vmul.f32 %v1455, 0.5
    %v1457 = vadd.f32 %v1456, 0.5
    %v1458 = vmul.f32 %v1452, %v1348
    %v1459 = vmul.f32 %v1448, %v1453
    %v1460 = vadd.f32 %v1458, %v1459
    %v1461 = vtanh.pop %v1460
    %v1462 = vmul.f32 %v1457, %v1461
    %s1463 = smul.u32 7, 4
    %s1464 = smul.addr %s1463, 8
    %s1465 = scalar_lea.vmem [#allocation4], %s1464
    %v1466 = vld [vmem:[%s1465] sm:$0xff]
    %v1467 = vld [vmem:[%s1465 + $0x8] sm:$0xff]
    %v1468 = vld [vmem:[%s1465 + $0x10] sm:$0xff]
    %v1469 = vld [vmem:[%s1465 + $0x18] sm:$0xff]
    %v1470 = vpack.c.bf16 %v1462, %v1462
    %1471 = vmatprep.subr.bf16.mxu0 %v652
    %1472 = vmatpush1.bf16.msra.mxu0 %v651
    %1473 = vmatprep.subr.bf16.mxu0 %v648
    %1474 = vmatpush1.bf16.msra.mxu0 %v647
    %1475 = vmatprep.subr.bf16.mxu0 %v644
    %1476 = vmatpush1.bf16.msra.mxu0 %v643
    %1477 = vmatprep.subr.bf16.mxu0 %v640
    %1478 = vmatpush1.bf16.msra.mxu0 %v639
    %1479 = vmatprep.subr.bf16.mxu0 %v636
    %1480 = vmatpush1.bf16.msra.mxu0 %v635
    %1481 = vmatprep.subr.bf16.mxu0 %v632
    %1482 = vmatpush1.bf16.msra.mxu0 %v631
    %1483 = vmatprep.subr.bf16.mxu0 %v628
    %1484 = vmatpush1.bf16.msra.mxu0 %v627
    %1485 = vmatprep.subr.bf16.mxu0 %v624
    %1486 = vmatpush1.bf16.msra.mxu0 %v623
    %1487 = vmatprep.subr.bf16.mxu0 0
    %1488 = vmatpush2.bf16.msra.mxu0 0
    %1489 = vmatprep.subr.bf16.mxu0 0
    %1490 = vmatpush2.bf16.msra.mxu0 0
    %1491 = vmatprep.subr.bf16.mxu0 0
    %1492 = vmatpush2.bf16.msra.mxu0 0
    %1493 = vmatprep.subr.bf16.mxu0 0
    %1494 = vmatpush2.bf16.msra.mxu0 0
    %1495 = vmatprep.subr.bf16.mxu0 0
    %1496 = vmatpush2.bf16.msra.mxu0 0
    %1497 = vmatprep.subr.bf16.mxu0 0
    %1498 = vmatpush2.bf16.msra.mxu0 0
    %1499 = vmatprep.subr.bf16.mxu0 0
    %1500 = vmatpush2.bf16.msra.mxu0 0
    %1501 = vmatprep.subr.bf16.mxu0 0
    %1502 = vmatpush2.bf16.msra.mxu0 0
    %1503 = vmatprep.mubr.bf16.mxu0 0
    %1504 = vmatmul.mubr.bf16.gmra.mxu0 %v1470
    %v1505 = vpop.f32.mrf.mxu0
    %v1506 = vadd.f32 0.0, %v1505
    %v1507 = vpop.f32.mrf.mxu0
    %v1508 = vadd.f32 0.0, %v1507
    %v1509 = vpop.f32.mrf.mxu0
    %v1510 = vpop.f32.mrf.mxu0
    %1511 = vdwg.mxu0
    %1512 = vmatprep.subr.bf16.mxu0 %v654
    %1513 = vmatpush1.bf16.msra.mxu0 %v653
    %1514 = vmatprep.subr.bf16.mxu0 %v650
    %1515 = vmatpush1.bf16.msra.mxu0 %v649
    %1516 = vmatprep.subr.bf16.mxu0 %v646
    %1517 = vmatpush1.bf16.msra.mxu0 %v645
    %1518 = vmatprep.subr.bf16.mxu0 %v642
    %1519 = vmatpush1.bf16.msra.mxu0 %v641
    %1520 = vmatprep.subr.bf16.mxu0 %v638
    %1521 = vmatpush1.bf16.msra.mxu0 %v637
    %1522 = vmatprep.subr.bf16.mxu0 %v634
    %1523 = vmatpush1.bf16.msra.mxu0 %v633
    %1524 = vmatprep.subr.bf16.mxu0 %v630
    %1525 = vmatpush1.bf16.msra.mxu0 %v629
    %1526 = vmatprep.subr.bf16.mxu0 %v626
    %1527 = vmatpush1.bf16.msra.mxu0 %v625
    %1528 = vmatprep.subr.bf16.mxu0 0
    %1529 = vmatpush2.bf16.msra.mxu0 0
    %1530 = vmatprep.subr.bf16.mxu0 0
    %1531 = vmatpush2.bf16.msra.mxu0 0
    %1532 = vmatprep.subr.bf16.mxu0 0
    %1533 = vmatpush2.bf16.msra.mxu0 0
    %1534 = vmatprep.subr.bf16.mxu0 0
    %1535 = vmatpush2.bf16.msra.mxu0 0
    %1536 = vmatprep.subr.bf16.mxu0 0
    %1537 = vmatpush2.bf16.msra.mxu0 0
    %1538 = vmatprep.subr.bf16.mxu0 0
    %1539 = vmatpush2.bf16.msra.mxu0 0
    %1540 = vmatprep.subr.bf16.mxu0 0
    %1541 = vmatpush2.bf16.msra.mxu0 0
    %1542 = vmatprep.subr.bf16.mxu0 0
    %1543 = vmatpush2.bf16.msra.mxu0 0
    %1544 = vmatprep.mubr.bf16.mxu0 0
    %1545 = vmatmul.mubr.bf16.gmra.mxu0 %v1470
    %v1546 = vpop.f32.mrf.mxu0
    %v1547 = vadd.f32 0.0, %v1546
    %v1548 = vpop.f32.mrf.mxu0
    %v1549 = vadd.f32 0.0, %v1548
    %v1550 = vpop.f32.mrf.mxu0
    %v1551 = vpop.f32.mrf.mxu0
    %1552 = vdwg.mxu0
    %v1553 = vadd.f32 %v1466, %v1506
    %v1554 = vadd.f32 %v1467, %v1508
    %v1555 = vadd.f32 %v1468, %v1547
    %v1556 = vadd.f32 %v1469, %v1549
    %v1557 = vmul.f32 %v1553, 0.5
    %v1558 = vtanh.pop %v1557
    %v1559 = vmul.f32 %v1558, 0.5
    %v1560 = vadd.f32 %v1559, 0.5
    %v1561 = vmul.f32 %v1554, 0.5
    %v1562 = vtanh.pop %v1561
    %v1563 = vmul.f32 %v1562, 0.5
    %v1564 = vadd.f32 %v1563, 0.5
    %v1565 = vtanh.pop %v1555
    %v1566 = vmul.f32 %v1556, 0.5
    %v1567 = vtanh.pop %v1566
    %v1568 = vmul.f32 %v1567, 0.5
    %v1569 = vadd.f32 %v1568, 0.5
    %v1570 = vmul.f32 %v1564, %v1460
    %v1571 = vmul.f32 %v1560, %v1565
    %v1572 = vadd.f32 %v1570, %v1571
    %v1573 = vtanh.pop %v1572
    %v1574 = vmul.f32 %v1569, %v1573
    %1575 = vst [vmem:[#allocation2] sm:$0xff] %v1574
    %1576 = vst [vmem:[#allocation3] sm:$0xff] %v1572
    %v1577 = vld [vmem:[#allocation11] sm:$0xff]
    %v1578 = vld [vmem:[#allocation11 + $0x8] sm:$0xff]
    %v1579 = vld [vmem:[#allocation11 + $0x10] sm:$0xff]
    %v1580 = vld [vmem:[#allocation11 + $0x18] sm:$0xff]
    %v1581 = vld [vmem:[#allocation11 + $0x20] sm:$0xff]
    %v1582 = vld [vmem:[#allocation11 + $0x28] sm:$0xff]
    %v1583 = vld [vmem:[#allocation11 + $0x30] sm:$0xff]
    %v1584 = vld [vmem:[#allocation11 + $0x38] sm:$0xff]
    %v1585 = vld [vmem:[#allocation11 + $0x40] sm:$0xff]
    %v1586 = vld [vmem:[#allocation11 + $0x48] sm:$0xff]
    %v1587 = vld [vmem:[#allocation11 + $0x50] sm:$0xff]
    %v1588 = vld [vmem:[#allocation11 + $0x58] sm:$0xff]
    %v1589 = vld [vmem:[#allocation11 + $0x60] sm:$0xff]
    %v1590 = vld [vmem:[#allocation11 + $0x68] sm:$0xff]
    %v1591 = vld [vmem:[#allocation11 + $0x70] sm:$0xff]
    %v1592 = vld [vmem:[#allocation11 + $0x78] sm:$0xff]
    %v1593 = vld [vmem:[%s4] sm:$0x1]
    %v1595 = vlaneseq
    %v1596 = vshrl.u32 %v1595, 7
    %v1597 = vsub.s32 0, %v1596
    %v1598 = vrot.slane %v1593, %v1597
    %1600 = vmatprep.subr.mxu0 0.0
    %1601 = vmatpush1.msra.mxu0 %v1592
    %1602 = vmatprep.subr.mxu0 0.0
    %1603 = vmatpush1.msra.mxu0 %v1591
    %1604 = vmatprep.subr.mxu0 0.0
    %1605 = vmatpush1.msra.mxu0 %v1590
    %1606 = vmatprep.subr.mxu0 0.0
    %1607 = vmatpush1.msra.mxu0 %v1589
    %1608 = vmatprep.subr.mxu0 0.0
    %1609 = vmatpush1.msra.mxu0 %v1588
    %1610 = vmatprep.subr.mxu0 0.0
    %1611 = vmatpush1.msra.mxu0 %v1587
    %1612 = vmatprep.subr.mxu0 0.0
    %1613 = vmatpush1.msra.mxu0 %v1586
    %1614 = vmatprep.subr.mxu0 0.0
    %1615 = vmatpush1.msra.mxu0 %v1585
    %1616 = vmatprep.subr.mxu0 0.0
    %1617 = vmatpush1.msra.mxu0 %v1584
    %1618 = vmatprep.subr.mxu0 0.0
    %1619 = vmatpush1.msra.mxu0 %v1583
    %1620 = vmatprep.subr.mxu0 0.0
    %1621 = vmatpush1.msra.mxu0 %v1582
    %1622 = vmatprep.subr.mxu0 0.0
    %1623 = vmatpush1.msra.mxu0 %v1581
    %1624 = vmatprep.subr.mxu0 0.0
    %1625 = vmatpush1.msra.mxu0 %v1580
    %1626 = vmatprep.subr.mxu0 0.0
    %1627 = vmatpush1.msra.mxu0 %v1579
    %1628 = vmatprep.subr.mxu0 0.0
    %1629 = vmatpush1.msra.mxu0 %v1578
    %1630 = vmatprep.subr.mxu0 0.0
    %1631 = vmatpush1.msra.mxu0 %v1577
    %1632 = vmatprep.subr.mxu0 0.0
    %1633 = vmatpush2.msra.mxu0 0.0
    %1634 = vmatprep.subr.mxu0 0.0
    %1635 = vmatpush2.msra.mxu0 0.0
    %1636 = vmatprep.subr.mxu0 0.0
    %1637 = vmatpush2.msra.mxu0 0.0
    %1638 = vmatprep.subr.mxu0 0.0
    %1639 = vmatpush2.msra.mxu0 0.0
    %1640 = vmatprep.subr.mxu0 0.0
    %1641 = vmatpush2.msra.mxu0 0.0
    %1642 = vmatprep.subr.mxu0 0.0
    %1643 = vmatpush2.msra.mxu0 0.0
    %1644 = vmatprep.subr.mxu0 0.0
    %1645 = vmatpush2.msra.mxu0 0.0
    %1646 = vmatprep.subr.mxu0 0.0
    %1647 = vmatpush2.msra.mxu0 0.0
    %1648 = vmatprep.subr.mxu0 0.0
    %1649 = vmatpush2.msra.mxu0 0.0
    %1650 = vmatprep.subr.mxu0 0.0
    %1651 = vmatpush2.msra.mxu0 0.0
    %1652 = vmatprep.subr.mxu0 0.0
    %1653 = vmatpush2.msra.mxu0 0.0
    %1654 = vmatprep.subr.mxu0 0.0
    %1655 = vmatpush2.msra.mxu0 0.0
    %1656 = vmatprep.subr.mxu0 0.0
    %1657 = vmatpush2.msra.mxu0 0.0
    %1658 = vmatprep.subr.mxu0 0.0
    %1659 = vmatpush2.msra.mxu0 0.0
    %1660 = vmatprep.subr.mxu0 0.0
    %1661 = vmatpush2.msra.mxu0 0.0
    %1662 = vmatprep.subr.mxu0 0.0
    %1663 = vmatpush2.msra.mxu0 0.0
    %1664 = vmatprep.mubr.f32.mxu0 0.0
    %1665 = vmatmul.mubr.f32.gmra.mxu0 %v1574
    %v1666 = vpop.f32.mrf.mxu0
    %v1667 = vadd.f32 %v1598, %v1666
    %v1668 = vpop.f32.mrf.mxu0
    %1669 = vdwg.mxu0
    %1670 = vst [vmem:[#allocation13] sm:$0xff] %v1667
    // Predicated region
    $region42: #{tpu_custom_call.1} parent=1 // pred_check
      _
    $region43: #{tpu_custom_call.1} parent=1 // pred_check_branch
      %1672 = sbr.rel (0) target = $region45
    $region44: #{tpu_custom_call.1} parent=1 // pred_region
      %s1674 = ssub.s32 128, 128
      %1675 = vsyncadd [#allocation7], %s1674
      %s1677 = sshll.u32 [#allocation13], 4
      %s1678 = int_to_ptr.vmem [resolvable:$true] %s1677
      %1680 = dma.vmem_to_hbm [thread:$0]  %s1678, 128, %s5, [#allocation7]
    $region45: #{tpu_custom_call.1} parent=1 // pred_fallthru
      _
    // Predicated region
    $region46: #{tpu_custom_call.1} parent=1 // pred_check
      _
    $region47: #{tpu_custom_call.1} parent=1 // pred_check_branch
      %1682 = sbr.rel (0) target = $region49
    $region48: #{tpu_custom_call.1} parent=1 // pred_region
      %1683 = dma.done [#allocation7], 128
    $region49: #{tpu_custom_call.1} parent=1 // pred_fallthru
      _
    %1684 = vsyncpa [#allocation6], 1
    %1685 = vsyncpa [#allocation9], 1
    %1686 = vsyncpa [#allocation12], 1
    %1687 = vsyncpa [#allocation7], 1

</llo_original>
